<compile_context>
chip_gen: v6e
topology: v6e:2x2x1
jax: 0.10.0
libtpu: 0.0.40
codegen_flags: <defaults>
</compile_context>

<pallas_src>
import functools

import jax
import jax.numpy as jnp
from jax.experimental import pallas as pl
from jax.experimental.pallas import tpu as pltpu


# ------------------------------ fused kernel -------------------------------- #

def _vae_step_kernel(
    xin_ref,                      # (9, BS)  f32: [x_pred(3); label(3); x_prev(3)]
    eps_ref,                      # (N, BS)  f32 reparameterization noise
    w_enc_ref, b_enc_ref,         # (2F+2L, 9) bf16, (2F+2L, 1) f32
    w_head_ref, b_head_ref,       # (2N, F+L)  bf16, (2N, 1)    f32
    w_fus_a_ref, w_fus_z_ref, b_fus_ref,   # (D, F+L), (D, N) bf16, (D, 1) f32
    w_gen_ref, b_gen_ref,         # (3, D) bf16, (3, 1) f32
    out_ref,                      # (3N+3, BS) f32 packed slab: [z; mu; logvar; gen]
    mse_ref, kld_ref,             # (1, 1) SMEM scalars
    *, f_dim, l_dim, n_dim, inv_npx, inv_b,
):
    F, L, N = f_dim, l_dim, n_dim

    x = xin_ref[...]                      # (9, BS) f32
    x_gt = x[0:3, :]                      # ground-truth frame (f32 MSE target)

    def mm(w_ref, a):
        # bf16 MXU feed, f32 accumulation.
        return jnp.dot(w_ref[...], a.astype(jnp.bfloat16),
                       preferred_element_type=jnp.float32)

    def lrelu(y):                          # nn.LeakyReLU(0.01)
        return jnp.maximum(y, 0.01 * y)

    # ----- encoders: ONE block-structured matmul -----
    # rows 0:F      -> f_pred   (wf @ x_pred)
    # rows F:F+L    -> l_enc    (wl @ label)
    # rows F+L:2F+L -> f_prev   (wf @ x_prev)
    # rows 2F+L:end -> l_enc    (duplicate, keeps the fusion input contiguous)
    enc = lrelu(mm(w_enc_ref, x) + b_enc_ref[...])        # (2F+2L, BS)
    enc_pred = enc[0:F + L, :]                            # [f_pred; l_enc]
    enc_prev = enc[F + L:2 * (F + L), :]                  # [f_prev; l_enc]

    # ----- Gaussian_Predictor: one fused mu/logvar head matmul -----
    head = mm(w_head_ref, enc_pred) + b_head_ref[...]     # (2N, BS)
    mu = head[0:N, :]
    lv = head[N:2 * N, :]
    e = jnp.exp(0.5 * lv)                                 # single EUP pass
    z = mu + e * eps_ref[...]                             # reparameterization

    # ----- Decoder_Fusion: [f_prev; l_enc] part + z part -----
    d = lrelu(mm(w_fus_a_ref, enc_prev) + mm(w_fus_z_ref, z) + b_fus_ref[...])

    # ----- Generator -----
    gen = mm(w_gen_ref, d) + b_gen_ref[...]               # (3, BS)

    # packed, lane-dense output slab; row offsets 0, N, 2N, 3N are 8-aligned
    out_ref[0:N, :] = z
    out_ref[N:2 * N, :] = mu
    out_ref[2 * N:3 * N, :] = lv
    out_ref[3 * N:3 * N + 3, :] = gen

    # ----- losses, reduced while everything is still in vregs -----
    diff = gen - x_gt
    mse_ref[0, 0] = jnp.sum(diff * diff) * inv_npx              # MSELoss (mean)
    kld_ref[0, 0] = (-0.5) * jnp.sum(1.0 + lv - mu * mu - e * e) * inv_b


# ------------------------------ params & prep -------------------------------- #

def init_params(key, F_dim, L_dim, N_dim, D_out_dim):
    """Channels-first 1x1-conv weights: W (Cout, Cin), b (Cout, 1)."""
    def lin(k, cout, cin):
        kw, kb = jax.random.split(k)
        w = jax.random.normal(kw, (cout, cin), jnp.float32) * jnp.sqrt(2.0 / cin)
        b = jax.random.normal(kb, (cout, 1), jnp.float32) * 0.01
        return w, b

    keys = jax.random.split(key, 9)
    wf, bf_ = lin(keys[0], F_dim, 3)            # RGB_Encoder
    wl, bl = lin(keys[1], L_dim, 3)             # Label_Encoder
    wmu_f, bmu = lin(keys[2], N_dim, F_dim)     # Gaussian_Predictor (mu head)
    wmu_l, _ = lin(keys[3], N_dim, L_dim)
    wlv_f, blv = lin(keys[4], N_dim, F_dim)     # Gaussian_Predictor (logvar head)
    wlv_l, _ = lin(keys[5], N_dim, L_dim)
    wu_f, bu = lin(keys[6], D_out_dim, F_dim)   # Decoder_Fusion (split weights)
    wu_l, _ = lin(keys[7], D_out_dim, L_dim)
    ka, kb2 = jax.random.split(keys[8])
    wu_z, _ = lin(ka, D_out_dim, N_dim)
    wg, bg = lin(kb2, 3, D_out_dim)             # Generator
    return {
        "wf": wf, "bf": bf_, "wl": wl, "bl": bl,
        "wmu_f": wmu_f, "wmu_l": wmu_l, "bmu": bmu,
        "wlv_f": wlv_f, "wlv_l": wlv_l, "blv": blv,
        "wu_f": wu_f, "wu_l": wu_l, "wu_z": wu_z, "bu": bu,
        "wg": wg, "bg": bg,
    }


def _prep_weights(params, F, L):
    """Host-side weight fusion; weights cast to bf16 once, biases stay f32."""
    bf16 = jnp.bfloat16
    zF3 = jnp.zeros((F, 3), jnp.float32)
    zL3 = jnp.zeros((L, 3), jnp.float32)
    # block-structured encoder weight for input [x_pred(3); label(3); x_prev(3)]
    w_enc = jnp.concatenate([
        jnp.concatenate([params["wf"], zF3, zF3], axis=1),   # -> f_pred
        jnp.concatenate([zL3, params["wl"], zL3], axis=1),   # -> l_enc
        jnp.concatenate([zF3, zF3, params["wf"]], axis=1),   # -> f_prev
        jnp.concatenate([zL3, params["wl"], zL3], axis=1),   # -> l_enc (dup)
    ], axis=0).astype(bf16)
    b_enc = jnp.concatenate(
        [params["bf"], params["bl"], params["bf"], params["bl"]], axis=0)
    w_head = jnp.concatenate([
        jnp.concatenate([params["wmu_f"], params["wmu_l"]], axis=1),
        jnp.concatenate([params["wlv_f"], params["wlv_l"]], axis=1),
    ], axis=0).astype(bf16)
    b_head = jnp.concatenate([params["bmu"], params["blv"]], axis=0)
    w_fus_a = jnp.concatenate([params["wu_f"], params["wu_l"]], axis=1).astype(bf16)
    w_fus_z = params["wu_z"].astype(bf16)
    b_fus = params["bu"]
    w_gen = params["wg"].astype(bf16)
    b_gen = params["bg"]
    return (w_enc, b_enc, w_head, b_head, w_fus_a, w_fus_z, b_fus, w_gen, b_gen)


def _to_cbs(x):
    """(B, C, H, W) -> (C, B*H*W): batch fused into the lane axis."""
    return jnp.transpose(x, (1, 0, 2, 3)).reshape(x.shape[1], -1)


def _from_cbs(y, C, B, H, W):
    """(C, B*H*W) -> (B, C, H, W)."""
    return jnp.transpose(y.reshape(C, B, H, W), (1, 0, 2, 3))


# ------------------------------ model wrapper -------------------------------- #

def vae_one_step(x_prev, x_pred, p, eps, params, n_dim, beta=1.0):
    B, C, H, W = x_prev.shape
    BS = B * H * W
    N = n_dim
    F = params["wf"].shape[0]
    L = params["wl"].shape[0]
    D = params["wu_f"].shape[0]

    # One tiny XLA transpose each; everything downstream is lane-dense (BS lanes).
    xin = jnp.concatenate([_to_cbs(x_pred), _to_cbs(p), _to_cbs(x_prev)], axis=0)
    eps_c = _to_cbs(eps)
    weights = _prep_weights(params, F, L)

    def vmem_full(arr):
        return pl.BlockSpec(arr.shape, lambda i: (0, 0))

    smem_scalar = pl.BlockSpec(memory_space=pltpu.MemorySpace.SMEM)

    in_arrays = (xin, eps_c) + weights
    in_specs = [vmem_full(a) for a in in_arrays]

    slab_rows = 3 * N + 3
    out_specs = (pl.BlockSpec((slab_rows, BS), lambda i: (0, 0)),
                 smem_scalar, smem_scalar)
    out_shape = (
        jax.ShapeDtypeStruct((slab_rows, BS), jnp.float32),   # [z; mu; logvar; gen]
        jax.ShapeDtypeStruct((1, 1), jnp.float32),            # mse
        jax.ShapeDtypeStruct((1, 1), jnp.float32),            # kld
    )

    flops = 2 * BS * ((2 * F + 2 * L) * 9 + 2 * N * (F + L)
                      + D * (F + L) + D * N + 3 * D)
    transcendentals = N * BS
    bytes_accessed = 4 * (int(xin.size) + int(eps_c.size) + slab_rows * BS + 2) \
        + sum(int(w.size) * w.dtype.itemsize for w in weights)

    slab, mse, kld = pl.pallas_call(
        functools.partial(_vae_step_kernel,
                          f_dim=F, l_dim=L, n_dim=N,
                          inv_npx=1.0 / float(B * 3 * H * W),
                          inv_b=1.0 / float(B)),
        out_shape=out_shape,
        grid=(1,),
        in_specs=in_specs,
        out_specs=out_specs,
        compiler_params=pltpu.CompilerParams(
            dimension_semantics=("arbitrary",)),
        cost_estimate=pl.CostEstimate(flops=flops,
                                      transcendentals=transcendentals,
                                      bytes_accessed=bytes_accessed),
    )(*in_arrays)

    z = _from_cbs(slab[0:N], N, B, H, W)
    mu = _from_cbs(slab[N:2 * N], N, B, H, W)
    logvar = _from_cbs(slab[2 * N:3 * N], N, B, H, W)
    gen = _from_cbs(slab[3 * N:3 * N + 3], 3, B, H, W)
    mse_s = mse[0, 0]
    kld_s = kld[0, 0]
    # Generate_PSNR (clamped so mse->0 does not yield inf/NaN; PyTorch would give inf)
    psnr = 20.0 * jnp.log10(1.0) - 10.0 * jnp.log10(jnp.maximum(mse_s, 1e-12))
    loss = mse_s + beta * kld_s
    return gen, z, mu, logvar, mse_s, kld_s, psnr, loss


# ------------------------------ pure-JAX reference --------------------------- #

def vae_one_step_reference(x_prev, x_pred, p, eps, params, n_dim, beta=1.0):
    """Reference with the same bf16-fed / f32-accumulated matmuls as the kernel."""
    B, C, H, W = x_prev.shape
    S = H * W
    xp = x_prev.reshape(B, C, S)
    xg = x_pred.reshape(B, C, S)
    pf = p.reshape(B, C, S)
    ef = eps.reshape(B, n_dim, S)

    def mm(w, x):
        return jnp.einsum("oc,bcs->bos", w.astype(jnp.bfloat16),
                          x.astype(jnp.bfloat16),
                          preferred_element_type=jnp.float32)

    def conv(w, b, x, act):
        y = mm(w, x) + b[None]
        return jnp.maximum(y, 0.01 * y) if act else y

    f_prev = conv(params["wf"], params["bf"], xp, True)
    f_pred = conv(params["wf"], params["bf"], xg, True)
    l_enc = conv(params["wl"], params["bl"], pf, True)
    mu = mm(params["wmu_f"], f_pred) + mm(params["wmu_l"], l_enc) + params["bmu"][None]
    lv = mm(params["wlv_f"], f_pred) + mm(params["wlv_l"], l_enc) + params["blv"][None]
    z = mu + jnp.exp(0.5 * lv) * ef
    d = (mm(params["wu_f"], f_prev) + mm(params["wu_l"], l_enc)
         + mm(params["wu_z"], z) + params["bu"][None])
    d = jnp.maximum(d, 0.01 * d)
    gen = mm(params["wg"], d) + params["bg"][None]
    mse = jnp.mean((gen - xg) ** 2)
    kld = -0.5 * jnp.sum(1.0 + lv - mu * mu - jnp.exp(lv)) / B
    psnr = 20.0 * jnp.log10(1.0) - 10.0 * jnp.log10(jnp.maximum(mse, 1e-12))
    loss = mse + beta * kld
    return (gen.reshape(B, 3, H, W), z.reshape(B, n_dim, H, W),
            mu.reshape(B, n_dim, H, W), lv.reshape(B, n_dim, H, W),
            mse, kld, psnr, loss)


# ----------------------------------- main ------------------------------------ #

if __name__ == "__main__":
    # args.* (synthetic, small)
    B, H, W = 2, 16, 16
    F_dim, L_dim, N_dim, D_out_dim = 32, 16, 8, 32
    beta = 1.0  # kl_annealing.get_beta() with kl_anneal_type='NONE'

    key = jax.random.PRNGKey(0)
    k_prev, k_pred, k_lab, k_eps, k_par = jax.random.split(key, 5)
    x_prev = jax.random.uniform(k_prev, (B, 3, H, W), jnp.float32)   # img[t-1]
    x_pred = jax.random.uniform(k_pred, (B, 3, H, W), jnp.float32)   # img[t]
    label = jax.random.uniform(k_lab, (B, 3, H, W), jnp.float32)     # label[t]
    eps = jax.random.normal(k_eps, (B, N_dim, H, W), jnp.float32)    # reparam noise

    params = init_params(k_par, F_dim, L_dim, N_dim, D_out_dim)

    step_fn = jax.jit(functools.partial(vae_one_step, n_dim=N_dim, beta=beta))
    outs = step_fn(x_prev, x_pred, label, eps, params)
    outs = jax.block_until_ready(outs)
    gen, z, mu, logvar, mse, kld, psnr, loss = outs

    # correctness vs pure-JAX reference (same bf16 MXU feed, f32 accumulation)
    ref = vae_one_step_reference(x_prev, x_pred, label, eps, params, N_dim, beta)
    names = ("gen", "z", "mu", "logvar", "mse", "kld", "psnr", "loss")
    for name, got, want in zip(names, outs, ref):
        assert jnp.allclose(got, want, rtol=2e-3, atol=2e-3), f"mismatch: {name}"

    assert gen.shape == (B, 3, H, W)
    assert z.shape == (B, N_dim, H, W)
    assert mu.shape == (B, N_dim, H, W) and logvar.shape == (B, N_dim, H, W)
    assert bool(jnp.isfinite(loss)) and bool(jnp.isfinite(psnr))
    print("KERNEL_OK")
</pallas_src>

<mosaic_0001>
module attributes {stable_mosaic.version = 11 : i64} {
  func.func @_vae_step_kernel(%arg0: i32, %arg1: memref<9x512xf32, #tpu.memory_space<vmem>>, %arg2: memref<8x512xf32, #tpu.memory_space<vmem>>, %arg3: memref<96x9xbf16, #tpu.memory_space<vmem>>, %arg4: memref<96x1xf32, #tpu.memory_space<vmem>>, %arg5: memref<16x48xbf16, #tpu.memory_space<vmem>>, %arg6: memref<16x1xf32, #tpu.memory_space<vmem>>, %arg7: memref<32x48xbf16, #tpu.memory_space<vmem>>, %arg8: memref<32x8xbf16, #tpu.memory_space<vmem>>, %arg9: memref<32x1xf32, #tpu.memory_space<vmem>>, %arg10: memref<3x32xbf16, #tpu.memory_space<vmem>>, %arg11: memref<3x1xf32, #tpu.memory_space<vmem>>, %arg12: memref<27x512xf32, #tpu.memory_space<vmem>>, %arg13: memref<1x1xf32, #tpu.memory_space<smem>>, %arg14: memref<1x1xf32, #tpu.memory_space<smem>>) attributes {dimension_semantics = [#tpu.dimension_semantics<arbitrary>], iteration_bounds = array<i64: 1>, scalar_prefetch = 0 : i64, scratch_operands = 0 : i64, tpu.core_type = #tpu.core_type<tc>, window_params = [{pipeline_mode = #tpu.pipeline_mode<synchronous>, transform_indices = @transform_0, window_bounds = array<i64: 9, 512>}, {pipeline_mode = #tpu.pipeline_mode<synchronous>, transform_indices = @transform_1, window_bounds = array<i64: 8, 512>}, {pipeline_mode = #tpu.pipeline_mode<synchronous>, transform_indices = @transform_2, window_bounds = array<i64: 96, 9>}, {pipeline_mode = #tpu.pipeline_mode<synchronous>, transform_indices = @transform_3, window_bounds = array<i64: 96, 1>}, {pipeline_mode = #tpu.pipeline_mode<synchronous>, transform_indices = @transform_4, window_bounds = array<i64: 16, 48>}, {pipeline_mode = #tpu.pipeline_mode<synchronous>, transform_indices = @transform_5, window_bounds = array<i64: 16, 1>}, {pipeline_mode = #tpu.pipeline_mode<synchronous>, transform_indices = @transform_6, window_bounds = array<i64: 32, 48>}, {pipeline_mode = #tpu.pipeline_mode<synchronous>, transform_indices = @transform_7, window_bounds = array<i64: 32, 8>}, {pipeline_mode = #tpu.pipeline_mode<synchronous>, transform_indices = @transform_8, window_bounds = array<i64: 32, 1>}, {pipeline_mode = #tpu.pipeline_mode<synchronous>, transform_indices = @transform_9, window_bounds = array<i64: 3, 32>}, {pipeline_mode = #tpu.pipeline_mode<synchronous>, transform_indices = @transform_10, window_bounds = array<i64: 3, 1>}, {pipeline_mode = #tpu.pipeline_mode<synchronous>, transform_indices = @transform_11, window_bounds = array<i64: 27, 512>}, {transform_indices = @transform_12, window_bounds = array<i64: 1, 1>}, {transform_indices = @transform_13, window_bounds = array<i64: 1, 1>}]} {
    %c0 = arith.constant 0 : index
    %c0_0 = arith.constant 0 : index
    %0 = vector.load %arg1[%c0, %c0_0] : memref<9x512xf32, #tpu.memory_space<vmem>>, vector<9x512xf32>
    %1 = vector.extract_strided_slice %0 {offsets = [0, 0], sizes = [3, 512], strides = [1, 1]} : vector<9x512xf32> to vector<3x512xf32>
    %c0_1 = arith.constant 0 : index
    %c0_2 = arith.constant 0 : index
    %2 = vector.load %arg3[%c0_1, %c0_2] : memref<96x9xbf16, #tpu.memory_space<vmem>>, vector<96x9xbf16>
    %3 = arith.truncf %0 : vector<9x512xf32> to vector<9x512xbf16>
    %cst = arith.constant dense<0.000000e+00> : vector<96x512xf32>
    %4 = tpu.matmul %2, %3, %cst {dimension_numbers = #tpu.dot_dimension_numbers<[1], [0], [0], [1], [0, 0, 1, 1], [], []>} : vector<96x9xbf16>, vector<9x512xbf16>, vector<96x512xf32> -> vector<96x512xf32>
    %c0_3 = arith.constant 0 : index
    %c0_4 = arith.constant 0 : index
    %5 = vector.load %arg4[%c0_3, %c0_4] : memref<96x1xf32, #tpu.memory_space<vmem>>, vector<96x1xf32>
    %6 = vector.broadcast %5 : vector<96x1xf32> to vector<96x512xf32>
    %7 = arith.addf %4, %6 : vector<96x512xf32>
    %cst_5 = arith.constant 0.00999999977 : f32
    %8 = vector.broadcast %cst_5 : f32 to vector<96x512xf32>
    %9 = arith.mulf %8, %7 : vector<96x512xf32>
    %10 = arith.maximumf %7, %9 : vector<96x512xf32>
    %11 = vector.extract_strided_slice %10 {offsets = [0, 0], sizes = [48, 512], strides = [1, 1]} : vector<96x512xf32> to vector<48x512xf32>
    %12 = vector.extract_strided_slice %10 {offsets = [48, 0], sizes = [48, 512], strides = [1, 1]} : vector<96x512xf32> to vector<48x512xf32>
    %c0_6 = arith.constant 0 : index
    %c0_7 = arith.constant 0 : index
    %13 = vector.load %arg5[%c0_6, %c0_7] : memref<16x48xbf16, #tpu.memory_space<vmem>>, vector<16x48xbf16>
    %14 = arith.truncf %11 : vector<48x512xf32> to vector<48x512xbf16>
    %cst_8 = arith.constant dense<0.000000e+00> : vector<16x512xf32>
    %15 = tpu.matmul %13, %14, %cst_8 {dimension_numbers = #tpu.dot_dimension_numbers<[1], [0], [0], [1], [0, 0, 1, 1], [], []>} : vector<16x48xbf16>, vector<48x512xbf16>, vector<16x512xf32> -> vector<16x512xf32>
    %c0_9 = arith.constant 0 : index
    %c0_10 = arith.constant 0 : index
    %16 = vector.load %arg6[%c0_9, %c0_10] : memref<16x1xf32, #tpu.memory_space<vmem>>, vector<16x1xf32>
    %17 = vector.broadcast %16 : vector<16x1xf32> to vector<16x512xf32>
    %18 = arith.addf %15, %17 : vector<16x512xf32>
    %19 = vector.extract_strided_slice %18 {offsets = [0, 0], sizes = [8, 512], strides = [1, 1]} : vector<16x512xf32> to vector<8x512xf32>
    %20 = vector.extract_strided_slice %18 {offsets = [8, 0], sizes = [8, 512], strides = [1, 1]} : vector<16x512xf32> to vector<8x512xf32>
    %cst_11 = arith.constant 5.000000e-01 : f32
    %21 = vector.broadcast %cst_11 : f32 to vector<8x512xf32>
    %22 = arith.mulf %21, %20 : vector<8x512xf32>
    %23 = math.exp %22 : vector<8x512xf32>
    %c0_12 = arith.constant 0 : index
    %c0_13 = arith.constant 0 : index
    %24 = vector.load %arg2[%c0_12, %c0_13] : memref<8x512xf32, #tpu.memory_space<vmem>>, vector<8x512xf32>
    %25 = arith.mulf %23, %24 : vector<8x512xf32>
    %26 = arith.addf %19, %25 : vector<8x512xf32>
    %c0_14 = arith.constant 0 : index
    %c0_15 = arith.constant 0 : index
    %27 = vector.load %arg7[%c0_14, %c0_15] : memref<32x48xbf16, #tpu.memory_space<vmem>>, vector<32x48xbf16>
    %28 = arith.truncf %12 : vector<48x512xf32> to vector<48x512xbf16>
    %cst_16 = arith.constant dense<0.000000e+00> : vector<32x512xf32>
    %29 = tpu.matmul %27, %28, %cst_16 {dimension_numbers = #tpu.dot_dimension_numbers<[1], [0], [0], [1], [0, 0, 1, 1], [], []>} : vector<32x48xbf16>, vector<48x512xbf16>, vector<32x512xf32> -> vector<32x512xf32>
    %c0_17 = arith.constant 0 : index
    %c0_18 = arith.constant 0 : index
    %30 = vector.load %arg8[%c0_17, %c0_18] : memref<32x8xbf16, #tpu.memory_space<vmem>>, vector<32x8xbf16>
    %31 = arith.truncf %26 : vector<8x512xf32> to vector<8x512xbf16>
    %cst_19 = arith.constant dense<0.000000e+00> : vector<32x512xf32>
    %32 = tpu.matmul %30, %31, %cst_19 {dimension_numbers = #tpu.dot_dimension_numbers<[1], [0], [0], [1], [0, 0, 1, 1], [], []>} : vector<32x8xbf16>, vector<8x512xbf16>, vector<32x512xf32> -> vector<32x512xf32>
    %33 = arith.addf %29, %32 : vector<32x512xf32>
    %c0_20 = arith.constant 0 : index
    %c0_21 = arith.constant 0 : index
    %34 = vector.load %arg9[%c0_20, %c0_21] : memref<32x1xf32, #tpu.memory_space<vmem>>, vector<32x1xf32>
    %35 = vector.broadcast %34 : vector<32x1xf32> to vector<32x512xf32>
    %36 = arith.addf %33, %35 : vector<32x512xf32>
    %cst_22 = arith.constant 0.00999999977 : f32
    %37 = vector.broadcast %cst_22 : f32 to vector<32x512xf32>
    %38 = arith.mulf %37, %36 : vector<32x512xf32>
    %39 = arith.maximumf %36, %38 : vector<32x512xf32>
    %c0_23 = arith.constant 0 : index
    %c0_24 = arith.constant 0 : index
    %40 = vector.load %arg10[%c0_23, %c0_24] : memref<3x32xbf16, #tpu.memory_space<vmem>>, vector<3x32xbf16>
    %41 = arith.truncf %39 : vector<32x512xf32> to vector<32x512xbf16>
    %cst_25 = arith.constant dense<0.000000e+00> : vector<3x512xf32>
    %42 = tpu.matmul %40, %41, %cst_25 {dimension_numbers = #tpu.dot_dimension_numbers<[1], [0], [0], [1], [0, 0, 1, 1], [], []>} : vector<3x32xbf16>, vector<32x512xbf16>, vector<3x512xf32> -> vector<3x512xf32>
    %c0_26 = arith.constant 0 : index
    %c0_27 = arith.constant 0 : index
    %43 = vector.load %arg11[%c0_26, %c0_27] : memref<3x1xf32, #tpu.memory_space<vmem>>, vector<3x1xf32>
    %44 = vector.broadcast %43 : vector<3x1xf32> to vector<3x512xf32>
    %45 = arith.addf %42, %44 : vector<3x512xf32>
    %c0_28 = arith.constant 0 : index
    %c0_29 = arith.constant 0 : index
    %46 = vector.load %arg12[%c0_28, %c0_29] : memref<27x512xf32, #tpu.memory_space<vmem>>, vector<8x512xf32>
    tpu.vector_store %arg12[%c0_28, %c0_29], %26 {strides = array<i32>} : memref<27x512xf32, #tpu.memory_space<vmem>>, vector<8x512xf32>,
    %c8 = arith.constant 8 : index
    %c0_30 = arith.constant 0 : index
    %47 = vector.load %arg12[%c8, %c0_30] : memref<27x512xf32, #tpu.memory_space<vmem>>, vector<8x512xf32>
    tpu.vector_store %arg12[%c8, %c0_30], %19 {strides = array<i32>} : memref<27x512xf32, #tpu.memory_space<vmem>>, vector<8x512xf32>,
    %c16 = arith.constant 16 : index
    %c0_31 = arith.constant 0 : index
    %48 = vector.load %arg12[%c16, %c0_31] : memref<27x512xf32, #tpu.memory_space<vmem>>, vector<8x512xf32>
    tpu.vector_store %arg12[%c16, %c0_31], %20 {strides = array<i32>} : memref<27x512xf32, #tpu.memory_space<vmem>>, vector<8x512xf32>,
    %c24 = arith.constant 24 : index
    %c0_32 = arith.constant 0 : index
    %49 = vector.load %arg12[%c24, %c0_32] : memref<27x512xf32, #tpu.memory_space<vmem>>, vector<3x512xf32>
    tpu.vector_store %arg12[%c24, %c0_32], %45 {strides = array<i32>} : memref<27x512xf32, #tpu.memory_space<vmem>>, vector<3x512xf32>,
    %50 = arith.subf %45, %1 : vector<3x512xf32>
    %51 = arith.mulf %50, %50 : vector<3x512xf32>
    %52 = vector.shape_cast %51 : vector<3x512xf32> to vector<1x3x512xf32>
    %cst_33 = arith.constant dense<0.000000e+00> : vector<1xf32>
    %53 = vector.multi_reduction <add>, %52, %cst_33 [1, 2] : vector<1x3x512xf32> to vector<1xf32>
    %54 = vector.shape_cast %53 : vector<1xf32> to vector<1x1x1xf32>
    %55 = vector.extract %54[0, 0, 0] : f32 from vector<1x1x1xf32>
    %cst_34 = arith.constant 6.51041686E-4 : f32
    %56 = arith.mulf %55, %cst_34 : f32
    %c0_35 = arith.constant 0 : index
    %c0_36 = arith.constant 0 : index
    %57 = memref.load %arg13[%c0_35, %c0_36] : memref<1x1xf32, #tpu.memory_space<smem>>
    memref.store %56, %arg13[%c0_35, %c0_36] : memref<1x1xf32, #tpu.memory_space<smem>>
    %cst_37 = arith.constant 1.000000e+00 : f32
    %58 = vector.broadcast %cst_37 : f32 to vector<8x512xf32>
    %59 = arith.addf %58, %20 : vector<8x512xf32>
    %60 = arith.mulf %19, %19 : vector<8x512xf32>
    %61 = arith.subf %59, %60 : vector<8x512xf32>
    %62 = arith.mulf %23, %23 : vector<8x512xf32>
    %63 = arith.subf %61, %62 : vector<8x512xf32>
    %64 = vector.shape_cast %63 : vector<8x512xf32> to vector<1x8x512xf32>
    %cst_38 = arith.constant dense<0.000000e+00> : vector<1xf32>
    %65 = vector.multi_reduction <add>, %64, %cst_38 [1, 2] : vector<1x8x512xf32> to vector<1xf32>
    %66 = vector.shape_cast %65 : vector<1xf32> to vector<1x1x1xf32>
    %67 = vector.extract %66[0, 0, 0] : f32 from vector<1x1x1xf32>
    %cst_39 = arith.constant -5.000000e-01 : f32
    %68 = arith.mulf %cst_39, %67 : f32
    %cst_40 = arith.constant 5.000000e-01 : f32
    %69 = arith.mulf %68, %cst_40 : f32
    %c0_41 = arith.constant 0 : index
    %c0_42 = arith.constant 0 : index
    %70 = memref.load %arg14[%c0_41, %c0_42] : memref<1x1xf32, #tpu.memory_space<smem>>
    memref.store %69, %arg14[%c0_41, %c0_42] : memref<1x1xf32, #tpu.memory_space<smem>>
    return
  }
  func.func @transform_0(%arg0: i32) -> (i32, i32) {
    %c0_i32 = arith.constant 0 : i32
    %c0_i32_0 = arith.constant 0 : i32
    %c0_i32_1 = arith.constant 0 : i32
    return %c0_i32, %c0_i32_0 : i32, i32
  }
  func.func @transform_1(%arg0: i32) -> (i32, i32) {
    %c0_i32 = arith.constant 0 : i32
    %c0_i32_0 = arith.constant 0 : i32
    %c0_i32_1 = arith.constant 0 : i32
    return %c0_i32, %c0_i32_0 : i32, i32
  }
  func.func @transform_2(%arg0: i32) -> (i32, i32) {
    %c0_i32 = arith.constant 0 : i32
    %c0_i32_0 = arith.constant 0 : i32
    %c0_i32_1 = arith.constant 0 : i32
    return %c0_i32, %c0_i32_0 : i32, i32
  }
  func.func @transform_3(%arg0: i32) -> (i32, i32) {
    %c0_i32 = arith.constant 0 : i32
    %c0_i32_0 = arith.constant 0 : i32
    %c0_i32_1 = arith.constant 0 : i32
    return %c0_i32, %c0_i32_0 : i32, i32
  }
  func.func @transform_4(%arg0: i32) -> (i32, i32) {
    %c0_i32 = arith.constant 0 : i32
    %c0_i32_0 = arith.constant 0 : i32
    %c0_i32_1 = arith.constant 0 : i32
    return %c0_i32, %c0_i32_0 : i32, i32
  }
  func.func @transform_5(%arg0: i32) -> (i32, i32) {
    %c0_i32 = arith.constant 0 : i32
    %c0_i32_0 = arith.constant 0 : i32
    %c0_i32_1 = arith.constant 0 : i32
    return %c0_i32, %c0_i32_0 : i32, i32
  }
  func.func @transform_6(%arg0: i32) -> (i32, i32) {
    %c0_i32 = arith.constant 0 : i32
    %c0_i32_0 = arith.constant 0 : i32
    %c0_i32_1 = arith.constant 0 : i32
    return %c0_i32, %c0_i32_0 : i32, i32
  }
  func.func @transform_7(%arg0: i32) -> (i32, i32) {
    %c0_i32 = arith.constant 0 : i32
    %c0_i32_0 = arith.constant 0 : i32
    %c0_i32_1 = arith.constant 0 : i32
    return %c0_i32, %c0_i32_0 : i32, i32
  }
  func.func @transform_8(%arg0: i32) -> (i32, i32) {
    %c0_i32 = arith.constant 0 : i32
    %c0_i32_0 = arith.constant 0 : i32
    %c0_i32_1 = arith.constant 0 : i32
    return %c0_i32, %c0_i32_0 : i32, i32
  }
  func.func @transform_9(%arg0: i32) -> (i32, i32) {
    %c0_i32 = arith.constant 0 : i32
    %c0_i32_0 = arith.constant 0 : i32
    %c0_i32_1 = arith.constant 0 : i32
    return %c0_i32, %c0_i32_0 : i32, i32
  }
  func.func @transform_10(%arg0: i32) -> (i32, i32) {
    %c0_i32 = arith.constant 0 : i32
    %c0_i32_0 = arith.constant 0 : i32
    %c0_i32_1 = arith.constant 0 : i32
    return %c0_i32, %c0_i32_0 : i32, i32
  }
  func.func @transform_11(%arg0: i32) -> (i32, i32) {
    %c0_i32 = arith.constant 0 : i32
    %c0_i32_0 = arith.constant 0 : i32
    %c0_i32_1 = arith.constant 0 : i32
    return %c0_i32, %c0_i32_0 : i32, i32
  }
  func.func @transform_12(%arg0: i32) -> (i32, i32) {
    %c0_i32 = arith.constant 0 : i32
    %c0_i32_0 = arith.constant 0 : i32
    %c0_i32_1 = arith.constant 0 : i32
    return %c0_i32, %c0_i32_0 : i32, i32
  }
  func.func @transform_13(%arg0: i32) -> (i32, i32) {
    %c0_i32 = arith.constant 0 : i32
    %c0_i32_0 = arith.constant 0 : i32
    %c0_i32_1 = arith.constant 0 : i32
    return %c0_i32, %c0_i32_0 : i32, i32
  }
}

</mosaic_0001>

<llo_original>
// kernel: vae_one_step.1
$region0: #{vae_one_step.1}
  #allocation0 [shape = 'u32[]', space=smem, size = 0x4, offset = 0x4, fixed_abs, tag = 'smem constant byte address 0x4 - core index']
  #allocation1 [shape = 'u32[144,128]{1,0:T(1,128)}', space=vmem, size = 0x12000, scoped, tag = 'internal scratch']
  %s0 = inlined_call_operand.vmem [shape: f32[9,512], index: 0, kind: input, shape index: {}]
  %s1 = inlined_call_operand.vmem [shape: f32[8,512], index: 1, kind: input, shape index: {}]
  %s2 = inlined_call_operand.vmem [shape: bf16[96,9], index: 2, kind: input, shape index: {}]
  %s3 = inlined_call_operand.vmem [shape: f32[96,1], index: 3, kind: input, shape index: {}]
  %s4 = inlined_call_operand.vmem [shape: bf16[16,48], index: 4, kind: input, shape index: {}]
  %s5 = inlined_call_operand.vmem [shape: f32[16,1], index: 5, kind: input, shape index: {}]
  %s6 = inlined_call_operand.vmem [shape: bf16[32,48], index: 6, kind: input, shape index: {}]
  %s7 = inlined_call_operand.vmem [shape: bf16[32,8], index: 7, kind: input, shape index: {}]
  %s8 = inlined_call_operand.vmem [shape: f32[32,1], index: 8, kind: input, shape index: {}]
  %s9 = inlined_call_operand.vmem [shape: bf16[3,32], index: 9, kind: input, shape index: {}]
  %s10 = inlined_call_operand.vmem [shape: f32[3,1], index: 10, kind: input, shape index: {}]
  %s11 = inlined_call_operand.vmem [shape: f32[27,512], index: 11, kind: output, shape index: {0}]
  %s12 = inlined_call_operand.hbm [shape: f32[1,1], index: 12, kind: output, shape index: {1}]
  %s13 = inlined_call_operand.hbm [shape: f32[1,1], index: 13, kind: output, shape index: {2}]
  %14 = xla_tuple %s11, %s12, %s13
  %s15 = sld [smem:[#allocation0]]
  $region70: #{vae_one_step.1} parent=0
    _
  %s17 = ssub.s32 1, %s15
  %s18 = scalar_select 0, %s17, %s15
  $region1: #{vae_one_step.1} parent=0
    #allocation2 [shape = 'u8[512]{0}', space=smem, size = 0x200, scoped, tag = 'output window, operand 1, single buffered']
    #allocation3 [shape = 's32[1]{0}', space=sflag, size = 0x4, scoped, tag = 'scoped memory for vae_one_step.1']
    #allocation4 [shape = 'u8[512]{0}', space=smem, size = 0x200, scoped, tag = 'output window, operand 2, single buffered']
    #allocation5 [shape = 's32[1]{0}', space=sflag, size = 0x4, scoped, tag = 'scoped memory for vae_one_step.1']
    %19 = vsyncpa [#allocation3], 0
    %20 = vsyncpa [#allocation5], 0
    // Predicated region
    $region2: #{vae_one_step.1} parent=1 // pred_check
      _
    $region3: #{vae_one_step.1} parent=1 // pred_check_branch
      %22 = sbr.rel (0) target = $region5
    $region4: #{vae_one_step.1} parent=1 // pred_region
      _
    $region5: #{vae_one_step.1} parent=1 // pred_fallthru
      _
    // Predicated region
    $region6: #{vae_one_step.1} parent=1 // pred_check
      _
    $region7: #{vae_one_step.1} parent=1 // pred_check_branch
      %24 = sbr.rel (0) target = $region9
    $region8: #{vae_one_step.1} parent=1 // pred_region
      _
    $region9: #{vae_one_step.1} parent=1 // pred_fallthru
      _
    // Predicated region
    $region10: #{vae_one_step.1} parent=1 // pred_check
      _
    $region11: #{vae_one_step.1} parent=1 // pred_check_branch
      %26 = sbr.rel (0) target = $region13
    $region12: #{vae_one_step.1} parent=1 // pred_region
      _
    $region13: #{vae_one_step.1} parent=1 // pred_fallthru
      _
    // Predicated region
    $region14: #{vae_one_step.1} parent=1 // pred_check
      _
    $region15: #{vae_one_step.1} parent=1 // pred_check_branch
      %28 = sbr.rel (0) target = $region17
    $region16: #{vae_one_step.1} parent=1 // pred_region
      _
    $region17: #{vae_one_step.1} parent=1 // pred_fallthru
      _
    // Predicated region
    $region18: #{vae_one_step.1} parent=1 // pred_check
      _
    $region19: #{vae_one_step.1} parent=1 // pred_check_branch
      %30 = sbr.rel (0) target = $region21
    $region20: #{vae_one_step.1} parent=1 // pred_region
      _
    $region21: #{vae_one_step.1} parent=1 // pred_fallthru
      _
    // Predicated region
    $region22: #{vae_one_step.1} parent=1 // pred_check
      _
    $region23: #{vae_one_step.1} parent=1 // pred_check_branch
      %32 = sbr.rel (0) target = $region25
    $region24: #{vae_one_step.1} parent=1 // pred_region
      _
    $region25: #{vae_one_step.1} parent=1 // pred_fallthru
      _
    // Predicated region
    $region26: #{vae_one_step.1} parent=1 // pred_check
      _
    $region27: #{vae_one_step.1} parent=1 // pred_check_branch
      %34 = sbr.rel (0) target = $region29
    $region28: #{vae_one_step.1} parent=1 // pred_region
      _
    $region29: #{vae_one_step.1} parent=1 // pred_fallthru
      _
    // Predicated region
    $region30: #{vae_one_step.1} parent=1 // pred_check
      _
    $region31: #{vae_one_step.1} parent=1 // pred_check_branch
      %36 = sbr.rel (0) target = $region33
    $region32: #{vae_one_step.1} parent=1 // pred_region
      _
    $region33: #{vae_one_step.1} parent=1 // pred_fallthru
      _
    // Predicated region
    $region34: #{vae_one_step.1} parent=1 // pred_check
      _
    $region35: #{vae_one_step.1} parent=1 // pred_check_branch
      %38 = sbr.rel (0) target = $region37
    $region36: #{vae_one_step.1} parent=1 // pred_region
      _
    $region37: #{vae_one_step.1} parent=1 // pred_fallthru
      _
    // Predicated region
    $region38: #{vae_one_step.1} parent=1 // pred_check
      _
    $region39: #{vae_one_step.1} parent=1 // pred_check_branch
      %40 = sbr.rel (0) target = $region41
    $region40: #{vae_one_step.1} parent=1 // pred_region
      _
    $region41: #{vae_one_step.1} parent=1 // pred_fallthru
      _
    // Predicated region
    $region42: #{vae_one_step.1} parent=1 // pred_check
      _
    $region43: #{vae_one_step.1} parent=1 // pred_check_branch
      %42 = sbr.rel (0) target = $region45
    $region44: #{vae_one_step.1} parent=1 // pred_region
      _
    $region45: #{vae_one_step.1} parent=1 // pred_fallthru
      _
    %v44 = vld [vmem:[%s0] sm:$0xff]
    %v45 = vld [vmem:[%s0 + $0x8] sm:$0xff]
    %v46 = vld [vmem:[%s0 + $0x10] sm:$0xff]
    %v47 = vld [vmem:[%s0 + $0x18] sm:$0xff]
    %v48 = vld [vmem:[%s0 + $0x20] sm:$0x1]
    %v49 = vld [vmem:[%s0 + $0x28] sm:$0x1]
    %v50 = vld [vmem:[%s0 + $0x30] sm:$0x1]
    %v51 = vld [vmem:[%s0 + $0x38] sm:$0x1]
    %v52 = vld [vmem:[%s2] sm:$0xf]
    %v53 = vld [vmem:[%s2 + $0x4] sm:$0xf]
    %v54 = vld [vmem:[%s2 + $0x8] sm:$0xf]
    %v55 = vld [vmem:[%s2 + $0xc] sm:$0xf]
    %v56 = vld [vmem:[%s2 + $0x10] sm:$0xf]
    %v57 = vld [vmem:[%s2 + $0x14] sm:$0xf]
    %v58 = vld [vmem:[%s2 + $0x18] sm:$0xf]
    %v59 = vld [vmem:[%s2 + $0x1c] sm:$0xf]
    %v60 = vld [vmem:[%s2 + $0x20] sm:$0xf]
    %v61 = vld [vmem:[%s2 + $0x24] sm:$0xf]
    %v62 = vld [vmem:[%s2 + $0x28] sm:$0xf]
    %v63 = vld [vmem:[%s2 + $0x2c] sm:$0xf]
    %v64 = vpack.c.bf16 %v48, %v44
    %v65 = vpack.c.bf16 %v49, %v45
    %v66 = vpack.c.bf16 %v50, %v46
    %v67 = vpack.c.bf16 %v51, %v47
    %v68 = vld [vmem:[%s3] sm:$0xff]
    %v69 = vld [vmem:[%s3 + $0x8] sm:$0xff]
    %v70 = vld [vmem:[%s3 + $0x10] sm:$0xff]
    %v71 = vld [vmem:[%s3 + $0x18] sm:$0xff]
    %v72 = vld [vmem:[%s3 + $0x20] sm:$0xff]
    %v73 = vld [vmem:[%s3 + $0x28] sm:$0xff]
    %v74 = vld [vmem:[%s3 + $0x30] sm:$0xff]
    %v75 = vld [vmem:[%s3 + $0x38] sm:$0xff]
    %v76 = vld [vmem:[%s3 + $0x40] sm:$0xff]
    %v77 = vld [vmem:[%s3 + $0x48] sm:$0xff]
    %v78 = vld [vmem:[%s3 + $0x50] sm:$0xff]
    %v79 = vld [vmem:[%s3 + $0x58] sm:$0xff]
    %81 = vset.pattern.permute.xlu0 0
    %82 = vperm.xlu0 %81, %v68
    %v83 = vpop.permute.xlu0 %82
    %86 = vset.pattern.permute.xlu0 0
    %87 = vperm.xlu0 %86, %v69
    %v88 = vpop.permute.xlu0 %87
    %91 = vset.pattern.permute.xlu0 0
    %92 = vperm.xlu0 %91, %v70
    %v93 = vpop.permute.xlu0 %92
    %96 = vset.pattern.permute.xlu0 0
    %97 = vperm.xlu0 %96, %v71
    %v98 = vpop.permute.xlu0 %97
    %101 = vset.pattern.permute.xlu0 0
    %102 = vperm.xlu0 %101, %v72
    %v103 = vpop.permute.xlu0 %102
    %106 = vset.pattern.permute.xlu0 0
    %107 = vperm.xlu0 %106, %v73
    %v108 = vpop.permute.xlu0 %107
    %111 = vset.pattern.permute.xlu0 0
    %112 = vperm.xlu0 %111, %v74
    %v113 = vpop.permute.xlu0 %112
    %116 = vset.pattern.permute.xlu0 0
    %117 = vperm.xlu0 %116, %v75
    %v118 = vpop.permute.xlu0 %117
    %121 = vset.pattern.permute.xlu0 0
    %122 = vperm.xlu0 %121, %v76
    %v123 = vpop.permute.xlu0 %122
    %126 = vset.pattern.permute.xlu0 0
    %127 = vperm.xlu0 %126, %v77
    %v128 = vpop.permute.xlu0 %127
    %131 = vset.pattern.permute.xlu0 0
    %132 = vperm.xlu0 %131, %v78
    %v133 = vpop.permute.xlu0 %132
    %136 = vset.pattern.permute.xlu0 0
    %137 = vperm.xlu0 %136, %v79
    %v138 = vpop.permute.xlu0 %137
    %v152 = vunpack.c.l.b16 %v52
    %v153 = vunpack.c.l.b16 %v53
    %v154 = vunpack.c.l.b16 %v54
    %v155 = vunpack.c.l.b16 %v55
    %v156 = vunpack.c.l.b16 %v56
    %v157 = vunpack.c.l.b16 %v57
    %v158 = vunpack.c.l.b16 %v58
    %v159 = vunpack.c.l.b16 %v59
    %v160 = vunpack.c.l.b16 %v60
    %v161 = vunpack.c.l.b16 %v61
    %v162 = vunpack.c.l.b16 %v62
    %v163 = vunpack.c.l.b16 %v63
    %v164 = vpack.c.b16 %v153, %v152
    %v165 = vpack.c.b16 %v155, %v154
    %v166 = vpack.c.b16 %v157, %v156
    %v167 = vpack.c.b16 %v159, %v158
    %v168 = vpack.c.b16 %v161, %v160
    %v169 = vpack.c.b16 %v163, %v162
    %vm170 = vcmask 72704
    %v172 = vsel %vm170, %v164, 0
    %v175 = vsel %vm170, %v165, 0
    %v178 = vsel %vm170, %v166, 0
    %v181 = vsel %vm170, %v167, 0
    %v184 = vsel %vm170, %v168, 0
    %v187 = vsel %vm170, %v169, 0
    %vm189 = vcmask 1043456
    %vm190 = vcmask 1044480
    %v191 = vsel %vm189, 4294967295, 65535
    %v192 = vsel %vm190, %v191, 0
    %v194 = vand.u32 %v64, %v192
    %v197 = vand.u32 %v65, %v192
    %v200 = vand.u32 %v66, %v192
    %v203 = vand.u32 %v67, %v192
    %205 = vmatprep.subr.bf16.mxu0 0
    %206 = vmatpush1.bf16.msra.mxu0 0
    %207 = vmatprep.subr.bf16.mxu0 0
    %208 = vmatpush1.bf16.msra.mxu0 0
    %209 = vmatprep.subr.bf16.mxu0 0
    %210 = vmatpush1.bf16.msra.mxu0 0
    %211 = vmatprep.subr.bf16.mxu0 0
    %212 = vmatpush1.bf16.msra.mxu0 0
    %213 = vmatprep.subr.bf16.mxu0 0
    %214 = vmatpush1.bf16.msra.mxu0 0
    %215 = vmatprep.subr.bf16.mxu0 0
    %216 = vmatpush1.bf16.msra.mxu0 0
    %217 = vmatprep.subr.bf16.mxu0 0
    %218 = vmatpush1.bf16.msra.mxu0 0
    %219 = vmatprep.subr.bf16.mxu0 %v197
    %220 = vmatpush1.bf16.msra.mxu0 %v194
    %221 = vmatprep.subr.bf16.mxu0 0
    %222 = vmatpush2.bf16.msra.mxu0 0
    %223 = vmatprep.subr.bf16.mxu0 0
    %224 = vmatpush2.bf16.msra.mxu0 0
    %225 = vmatprep.subr.bf16.mxu0 0
    %226 = vmatpush2.bf16.msra.mxu0 0
    %227 = vmatprep.subr.bf16.mxu0 0
    %228 = vmatpush2.bf16.msra.mxu0 0
    %229 = vmatprep.subr.bf16.mxu0 0
    %230 = vmatpush2.bf16.msra.mxu0 0
    %231 = vmatprep.subr.bf16.mxu0 0
    %232 = vmatpush2.bf16.msra.mxu0 0
    %233 = vmatprep.subr.bf16.mxu0 0
    %234 = vmatpush2.bf16.msra.mxu0 0
    %235 = vmatprep.subr.bf16.mxu0 0
    %236 = vmatpush2.bf16.msra.mxu0 0
    %237 = vmatprep.mubr.bf16.mxu0 0
    %238 = vmatmul.mubr.bf16.gmra.mxu0 %v172
    %v239 = vpop.f32.mrf.mxu0
    %v240 = vadd.f32 %v83, %v239
    %v241 = vpop.f32.mrf.mxu0
    %v242 = vadd.f32 %v83, %v241
    %v243 = vpop.f32.mrf.mxu0
    %v244 = vadd.f32 %v88, %v243
    %v245 = vpop.f32.mrf.mxu0
    %v246 = vadd.f32 %v88, %v245
    %247 = vmatprep.mubr.bf16.mxu0 0
    %248 = vmatmul.mubr.bf16.gmra.mxu0 %v175
    %v249 = vpop.f32.mrf.mxu0
    %v250 = vadd.f32 %v93, %v249
    %v251 = vpop.f32.mrf.mxu0
    %v252 = vadd.f32 %v93, %v251
    %v253 = vpop.f32.mrf.mxu0
    %v254 = vadd.f32 %v98, %v253
    %v255 = vpop.f32.mrf.mxu0
    %v256 = vadd.f32 %v98, %v255
    %257 = vmatprep.mubr.bf16.mxu0 0
    %258 = vmatmul.mubr.bf16.gmra.mxu0 %v178
    %v259 = vpop.f32.mrf.mxu0
    %v260 = vadd.f32 %v103, %v259
    %v261 = vpop.f32.mrf.mxu0
    %v262 = vadd.f32 %v103, %v261
    %v263 = vpop.f32.mrf.mxu0
    %v264 = vadd.f32 %v108, %v263
    %v265 = vpop.f32.mrf.mxu0
    %v266 = vadd.f32 %v108, %v265
    %267 = vmatprep.mubr.bf16.mxu0 0
    %268 = vmatmul.mubr.bf16.gmra.mxu0 %v181
    %v269 = vpop.f32.mrf.mxu0
    %v270 = vadd.f32 %v113, %v269
    %v271 = vpop.f32.mrf.mxu0
    %v272 = vadd.f32 %v113, %v271
    %v273 = vpop.f32.mrf.mxu0
    %v274 = vadd.f32 %v118, %v273
    %v275 = vpop.f32.mrf.mxu0
    %v276 = vadd.f32 %v118, %v275
    %277 = vmatprep.mubr.bf16.mxu0 0
    %278 = vmatmul.mubr.bf16.gmra.mxu0 %v184
    %v279 = vpop.f32.mrf.mxu0
    %v280 = vadd.f32 %v123, %v279
    %v281 = vpop.f32.mrf.mxu0
    %v282 = vadd.f32 %v123, %v281
    %v283 = vpop.f32.mrf.mxu0
    %v284 = vadd.f32 %v128, %v283
    %v285 = vpop.f32.mrf.mxu0
    %v286 = vadd.f32 %v128, %v285
    %287 = vmatprep.mubr.bf16.mxu0 0
    %288 = vmatmul.mubr.bf16.gmra.mxu0 %v187
    %v289 = vpop.f32.mrf.mxu0
    %v290 = vadd.f32 %v133, %v289
    %v291 = vpop.f32.mrf.mxu0
    %v292 = vadd.f32 %v133, %v291
    %v293 = vpop.f32.mrf.mxu0
    %v294 = vadd.f32 %v138, %v293
    %v295 = vpop.f32.mrf.mxu0
    %v296 = vadd.f32 %v138, %v295
    %297 = vdwg.mxu0
    %298 = vmatprep.subr.bf16.mxu0 0
    %299 = vmatpush1.bf16.msra.mxu0 0
    %300 = vmatprep.subr.bf16.mxu0 0
    %301 = vmatpush1.bf16.msra.mxu0 0
    %302 = vmatprep.subr.bf16.mxu0 0
    %303 = vmatpush1.bf16.msra.mxu0 0
    %304 = vmatprep.subr.bf16.mxu0 0
    %305 = vmatpush1.bf16.msra.mxu0 0
    %306 = vmatprep.subr.bf16.mxu0 0
    %307 = vmatpush1.bf16.msra.mxu0 0
    %308 = vmatprep.subr.bf16.mxu0 0
    %309 = vmatpush1.bf16.msra.mxu0 0
    %310 = vmatprep.subr.bf16.mxu0 0
    %311 = vmatpush1.bf16.msra.mxu0 0
    %312 = vmatprep.subr.bf16.mxu0 %v203
    %313 = vmatpush1.bf16.msra.mxu0 %v200
    %314 = vmatprep.subr.bf16.mxu0 0
    %315 = vmatpush2.bf16.msra.mxu0 0
    %316 = vmatprep.subr.bf16.mxu0 0
    %317 = vmatpush2.bf16.msra.mxu0 0
    %318 = vmatprep.subr.bf16.mxu0 0
    %319 = vmatpush2.bf16.msra.mxu0 0
    %320 = vmatprep.subr.bf16.mxu0 0
    %321 = vmatpush2.bf16.msra.mxu0 0
    %322 = vmatprep.subr.bf16.mxu0 0
    %323 = vmatpush2.bf16.msra.mxu0 0
    %324 = vmatprep.subr.bf16.mxu0 0
    %325 = vmatpush2.bf16.msra.mxu0 0
    %326 = vmatprep.subr.bf16.mxu0 0
    %327 = vmatpush2.bf16.msra.mxu0 0
    %328 = vmatprep.subr.bf16.mxu0 0
    %329 = vmatpush2.bf16.msra.mxu0 0
    %330 = vmatprep.mubr.bf16.mxu0 0
    %331 = vmatmul.mubr.bf16.gmra.mxu0 %v172
    %v332 = vpop.f32.mrf.mxu0
    %v333 = vadd.f32 %v83, %v332
    %v334 = vpop.f32.mrf.mxu0
    %v335 = vadd.f32 %v83, %v334
    %v336 = vpop.f32.mrf.mxu0
    %v337 = vadd.f32 %v88, %v336
    %v338 = vpop.f32.mrf.mxu0
    %v339 = vadd.f32 %v88, %v338
    %340 = vmatprep.mubr.bf16.mxu0 0
    %341 = vmatmul.mubr.bf16.gmra.mxu0 %v175
    %v342 = vpop.f32.mrf.mxu0
    %v343 = vadd.f32 %v93, %v342
    %v344 = vpop.f32.mrf.mxu0
    %v345 = vadd.f32 %v93, %v344
    %v346 = vpop.f32.mrf.mxu0
    %v347 = vadd.f32 %v98, %v346
    %v348 = vpop.f32.mrf.mxu0
    %v349 = vadd.f32 %v98, %v348
    %350 = vmatprep.mubr.bf16.mxu0 0
    %351 = vmatmul.mubr.bf16.gmra.mxu0 %v178
    %v352 = vpop.f32.mrf.mxu0
    %v353 = vadd.f32 %v103, %v352
    %v354 = vpop.f32.mrf.mxu0
    %v355 = vadd.f32 %v103, %v354
    %v356 = vpop.f32.mrf.mxu0
    %v357 = vadd.f32 %v108, %v356
    %v358 = vpop.f32.mrf.mxu0
    %v359 = vadd.f32 %v108, %v358
    %360 = vmatprep.mubr.bf16.mxu0 0
    %361 = vmatmul.mubr.bf16.gmra.mxu0 %v181
    %v362 = vpop.f32.mrf.mxu0
    %v363 = vadd.f32 %v113, %v362
    %v364 = vpop.f32.mrf.mxu0
    %v365 = vadd.f32 %v113, %v364
    %v366 = vpop.f32.mrf.mxu0
    %v367 = vadd.f32 %v118, %v366
    %v368 = vpop.f32.mrf.mxu0
    %v369 = vadd.f32 %v118, %v368
    %370 = vmatprep.mubr.bf16.mxu0 0
    %371 = vmatmul.mubr.bf16.gmra.mxu0 %v184
    %v372 = vpop.f32.mrf.mxu0
    %v373 = vadd.f32 %v123, %v372
    %v374 = vpop.f32.mrf.mxu0
    %v375 = vadd.f32 %v123, %v374
    %v376 = vpop.f32.mrf.mxu0
    %v377 = vadd.f32 %v128, %v376
    %v378 = vpop.f32.mrf.mxu0
    %v379 = vadd.f32 %v128, %v378
    %380 = vmatprep.mubr.bf16.mxu0 0
    %381 = vmatmul.mubr.bf16.gmra.mxu0 %v187
    %v382 = vpop.f32.mrf.mxu0
    %v383 = vadd.f32 %v133, %v382
    %v384 = vpop.f32.mrf.mxu0
    %v385 = vadd.f32 %v133, %v384
    %v386 = vpop.f32.mrf.mxu0
    %v387 = vadd.f32 %v138, %v386
    %v388 = vpop.f32.mrf.mxu0
    %v389 = vadd.f32 %v138, %v388
    %390 = vdwg.mxu0
    %v391 = vmul.f32 %v240, 0.01
    %v392 = vmul.f32 %v242, 0.01
    %v393 = vmul.f32 %v333, 0.01
    %v394 = vmul.f32 %v335, 0.01
    %v395 = vmul.f32 %v244, 0.01
    %v396 = vmul.f32 %v246, 0.01
    %v397 = vmul.f32 %v337, 0.01
    %v398 = vmul.f32 %v339, 0.01
    %v399 = vmul.f32 %v250, 0.01
    %v400 = vmul.f32 %v252, 0.01
    %v401 = vmul.f32 %v343, 0.01
    %v402 = vmul.f32 %v345, 0.01
    %v403 = vmul.f32 %v254, 0.01
    %v404 = vmul.f32 %v256, 0.01
    %v405 = vmul.f32 %v347, 0.01
    %v406 = vmul.f32 %v349, 0.01
    %v407 = vmul.f32 %v260, 0.01
    %v408 = vmul.f32 %v262, 0.01
    %v409 = vmul.f32 %v353, 0.01
    %v410 = vmul.f32 %v355, 0.01
    %v411 = vmul.f32 %v264, 0.01
    %v412 = vmul.f32 %v266, 0.01
    %v413 = vmul.f32 %v357, 0.01
    %v414 = vmul.f32 %v359, 0.01
    %v415 = vmul.f32 %v270, 0.01
    %v416 = vmul.f32 %v272, 0.01
    %v417 = vmul.f32 %v363, 0.01
    %v418 = vmul.f32 %v365, 0.01
    %v419 = vmul.f32 %v274, 0.01
    %v420 = vmul.f32 %v276, 0.01
    %v421 = vmul.f32 %v367, 0.01
    %v422 = vmul.f32 %v369, 0.01
    %v423 = vmul.f32 %v280, 0.01
    %v424 = vmul.f32 %v282, 0.01
    %v425 = vmul.f32 %v373, 0.01
    %v426 = vmul.f32 %v375, 0.01
    %v427 = vmul.f32 %v284, 0.01
    %v428 = vmul.f32 %v286, 0.01
    %v429 = vmul.f32 %v377, 0.01
    %v430 = vmul.f32 %v379, 0.01
    %v431 = vmul.f32 %v290, 0.01
    %v432 = vmul.f32 %v292, 0.01
    %v433 = vmul.f32 %v383, 0.01
    %v434 = vmul.f32 %v385, 0.01
    %v435 = vmul.f32 %v294, 0.01
    %v436 = vmul.f32 %v296, 0.01
    %v437 = vmul.f32 %v387, 0.01
    %v438 = vmul.f32 %v389, 0.01
    %v439 = vmax.f32 %v240, %v391
    %v440 = vmax.f32 %v242, %v392
    %v441 = vmax.f32 %v333, %v393
    %v442 = vmax.f32 %v335, %v394
    %v443 = vmax.f32 %v244, %v395
    %v444 = vmax.f32 %v246, %v396
    %v445 = vmax.f32 %v337, %v397
    %v446 = vmax.f32 %v339, %v398
    %v447 = vmax.f32 %v250, %v399
    %v448 = vmax.f32 %v252, %v400
    %v449 = vmax.f32 %v343, %v401
    %v450 = vmax.f32 %v345, %v402
    %v451 = vmax.f32 %v254, %v403
    %v452 = vmax.f32 %v256, %v404
    %v453 = vmax.f32 %v347, %v405
    %v454 = vmax.f32 %v349, %v406
    %v455 = vmax.f32 %v260, %v407
    %v456 = vmax.f32 %v262, %v408
    %v457 = vmax.f32 %v353, %v409
    %v458 = vmax.f32 %v355, %v410
    %v459 = vmax.f32 %v264, %v411
    %v460 = vmax.f32 %v266, %v412
    %v461 = vmax.f32 %v357, %v413
    %v462 = vmax.f32 %v359, %v414
    %v463 = vmax.f32 %v270, %v415
    %v464 = vmax.f32 %v272, %v416
    %v465 = vmax.f32 %v363, %v417
    %v466 = vmax.f32 %v365, %v418
    %v467 = vmax.f32 %v274, %v419
    %v468 = vmax.f32 %v276, %v420
    %v469 = vmax.f32 %v367, %v421
    %v470 = vmax.f32 %v369, %v422
    %v471 = vmax.f32 %v280, %v423
    %v472 = vmax.f32 %v282, %v424
    %v473 = vmax.f32 %v373, %v425
    %v474 = vmax.f32 %v375, %v426
    %v475 = vmax.f32 %v284, %v427
    %v476 = vmax.f32 %v286, %v428
    %v477 = vmax.f32 %v377, %v429
    %v478 = vmax.f32 %v379, %v430
    %v479 = vmax.f32 %v290, %v431
    %v480 = vmax.f32 %v292, %v432
    %v481 = vmax.f32 %v383, %v433
    %v482 = vmax.f32 %v385, %v434
    %v483 = vmax.f32 %v294, %v435
    %v484 = vmax.f32 %v296, %v436
    %v485 = vmax.f32 %v387, %v437
    %v486 = vmax.f32 %v389, %v438
    %v487 = vld [vmem:[%s4] sm:$0xf]
    %v488 = vld [vmem:[%s4 + $0x4] sm:$0xf]
    %v489 = vpack.c.bf16 %v443, %v439
    %v490 = vpack.c.bf16 %v444, %v440
    %v491 = vpack.c.bf16 %v445, %v441
    %v492 = vpack.c.bf16 %v446, %v442
    %v493 = vpack.c.bf16 %v451, %v447
    %v494 = vpack.c.bf16 %v452, %v448
    %v495 = vpack.c.bf16 %v453, %v449
    %v496 = vpack.c.bf16 %v454, %v450
    %v497 = vpack.c.bf16 %v459, %v455
    %v498 = vpack.c.bf16 %v460, %v456
    %v499 = vpack.c.bf16 %v461, %v457
    %v500 = vpack.c.bf16 %v462, %v458
    %v501 = vld [vmem:[%s5] sm:$0xff]
    %v502 = vld [vmem:[%s5 + $0x8] sm:$0xff]
    %504 = vset.pattern.permute.xlu0 0
    %505 = vperm.xlu0 %504, %v501
    %v506 = vpop.permute.xlu0 %505
    %509 = vset.pattern.permute.xlu0 0
    %510 = vperm.xlu0 %509, %v502
    %v511 = vpop.permute.xlu0 %510
    %v515 = vunpack.c.l.b16 %v487
    %v516 = vunpack.c.l.b16 %v488
    %v517 = vpack.c.b16 %v516, %v515
    %vm518 = vcmask 392192
    %v520 = vsel %vm518, %v517, 0
    %522 = vmatprep.subr.bf16.mxu0 0
    %523 = vmatpush1.bf16.msra.mxu0 0
    %524 = vmatprep.subr.bf16.mxu0 0
    %525 = vmatpush1.bf16.msra.mxu0 0
    %526 = vmatprep.subr.bf16.mxu0 0
    %527 = vmatpush1.bf16.msra.mxu0 0
    %528 = vmatprep.subr.bf16.mxu0 0
    %529 = vmatpush1.bf16.msra.mxu0 0
    %530 = vmatprep.subr.bf16.mxu0 0
    %531 = vmatpush1.bf16.msra.mxu0 0
    %532 = vmatprep.subr.bf16.mxu0 %v498
    %533 = vmatpush1.bf16.msra.mxu0 %v497
    %534 = vmatprep.subr.bf16.mxu0 %v494
    %535 = vmatpush1.bf16.msra.mxu0 %v493
    %536 = vmatprep.subr.bf16.mxu0 %v490
    %537 = vmatpush1.bf16.msra.mxu0 %v489
    %538 = vmatprep.subr.bf16.mxu0 0
    %539 = vmatpush2.bf16.msra.mxu0 0
    %540 = vmatprep.subr.bf16.mxu0 0
    %541 = vmatpush2.bf16.msra.mxu0 0
    %542 = vmatprep.subr.bf16.mxu0 0
    %543 = vmatpush2.bf16.msra.mxu0 0
    %544 = vmatprep.subr.bf16.mxu0 0
    %545 = vmatpush2.bf16.msra.mxu0 0
    %546 = vmatprep.subr.bf16.mxu0 0
    %547 = vmatpush2.bf16.msra.mxu0 0
    %548 = vmatprep.subr.bf16.mxu0 0
    %549 = vmatpush2.bf16.msra.mxu0 0
    %550 = vmatprep.subr.bf16.mxu0 0
    %551 = vmatpush2.bf16.msra.mxu0 0
    %552 = vmatprep.subr.bf16.mxu0 0
    %553 = vmatpush2.bf16.msra.mxu0 0
    %554 = vmatprep.mubr.bf16.mxu0 0
    %555 = vmatmul.mubr.bf16.gmra.mxu0 %v520
    %v556 = vpop.f32.mrf.mxu0
    %v557 = vadd.f32 %v506, %v556
    %v558 = vpop.f32.mrf.mxu0
    %v559 = vadd.f32 %v506, %v558
    %v560 = vpop.f32.mrf.mxu0
    %v561 = vadd.f32 %v511, %v560
    %v562 = vpop.f32.mrf.mxu0
    %v563 = vadd.f32 %v511, %v562
    %564 = vdwg.mxu0
    %565 = vmatprep.subr.bf16.mxu0 0
    %566 = vmatpush1.bf16.msra.mxu0 0
    %567 = vmatprep.subr.bf16.mxu0 0
    %568 = vmatpush1.bf16.msra.mxu0 0
    %569 = vmatprep.subr.bf16.mxu0 0
    %570 = vmatpush1.bf16.msra.mxu0 0
    %571 = vmatprep.subr.bf16.mxu0 0
    %572 = vmatpush1.bf16.msra.mxu0 0
    %573 = vmatprep.subr.bf16.mxu0 0
    %574 = vmatpush1.bf16.msra.mxu0 0
    %575 = vmatprep.subr.bf16.mxu0 %v500
    %576 = vmatpush1.bf16.msra.mxu0 %v499
    %577 = vmatprep.subr.bf16.mxu0 %v496
    %578 = vmatpush1.bf16.msra.mxu0 %v495
    %579 = vmatprep.subr.bf16.mxu0 %v492
    %580 = vmatpush1.bf16.msra.mxu0 %v491
    %581 = vmatprep.subr.bf16.mxu0 0
    %582 = vmatpush2.bf16.msra.mxu0 0
    %583 = vmatprep.subr.bf16.mxu0 0
    %584 = vmatpush2.bf16.msra.mxu0 0
    %585 = vmatprep.subr.bf16.mxu0 0
    %586 = vmatpush2.bf16.msra.mxu0 0
    %587 = vmatprep.subr.bf16.mxu0 0
    %588 = vmatpush2.bf16.msra.mxu0 0
    %589 = vmatprep.subr.bf16.mxu0 0
    %590 = vmatpush2.bf16.msra.mxu0 0
    %591 = vmatprep.subr.bf16.mxu0 0
    %592 = vmatpush2.bf16.msra.mxu0 0
    %593 = vmatprep.subr.bf16.mxu0 0
    %594 = vmatpush2.bf16.msra.mxu0 0
    %595 = vmatprep.subr.bf16.mxu0 0
    %596 = vmatpush2.bf16.msra.mxu0 0
    %597 = vmatprep.mubr.bf16.mxu0 0
    %598 = vmatmul.mubr.bf16.gmra.mxu0 %v520
    %v599 = vpop.f32.mrf.mxu0
    %v600 = vadd.f32 %v506, %v599
    %v601 = vpop.f32.mrf.mxu0
    %v602 = vadd.f32 %v506, %v601
    %v603 = vpop.f32.mrf.mxu0
    %v604 = vadd.f32 %v511, %v603
    %v605 = vpop.f32.mrf.mxu0
    %v606 = vadd.f32 %v511, %v605
    %607 = vdwg.mxu0
    %v608 = vmul.f32 %v561, 0.5
    %v609 = vmul.f32 %v563, 0.5
    %v610 = vmul.f32 %v604, 0.5
    %v611 = vmul.f32 %v606, 0.5
    %v612 = vmul.f32 %v608, 1.442695
    %v613 = vpow.pop %v612
    %v614 = vmul.f32 %v609, 1.442695
    %v615 = vpow.pop %v614
    %v616 = vmul.f32 %v610, 1.442695
    %v617 = vpow.pop %v616
    %v618 = vmul.f32 %v611, 1.442695
    %v619 = vpow.pop %v618
    %v620 = vld [vmem:[%s1] sm:$0xff]
    %v621 = vld [vmem:[%s1 + $0x8] sm:$0xff]
    %v622 = vld [vmem:[%s1 + $0x10] sm:$0xff]
    %v623 = vld [vmem:[%s1 + $0x18] sm:$0xff]
    %v624 = vmul.f32 %v613, %v620
    %v625 = vmul.f32 %v615, %v621
    %v626 = vmul.f32 %v617, %v622
    %v627 = vmul.f32 %v619, %v623
    %v628 = vadd.f32 %v557, %v624
    %v629 = vadd.f32 %v559, %v625
    %v630 = vadd.f32 %v600, %v626
    %v631 = vadd.f32 %v602, %v627
    %v632 = vld [vmem:[%s6] sm:$0xf]
    %v633 = vld [vmem:[%s6 + $0x4] sm:$0xf]
    %v634 = vld [vmem:[%s6 + $0x8] sm:$0xf]
    %v635 = vld [vmem:[%s6 + $0xc] sm:$0xf]
    %v636 = vpack.c.bf16 %v467, %v463
    %v637 = vpack.c.bf16 %v468, %v464
    %v638 = vpack.c.bf16 %v469, %v465
    %v639 = vpack.c.bf16 %v470, %v466
    %v640 = vpack.c.bf16 %v475, %v471
    %v641 = vpack.c.bf16 %v476, %v472
    %v642 = vpack.c.bf16 %v477, %v473
    %v643 = vpack.c.bf16 %v478, %v474
    %v644 = vpack.c.bf16 %v483, %v479
    %v645 = vpack.c.bf16 %v484, %v480
    %v646 = vpack.c.bf16 %v485, %v481
    %v647 = vpack.c.bf16 %v486, %v482
    %v648 = vld [vmem:[%s7] sm:$0xf]
    %v649 = vld [vmem:[%s7 + $0x4] sm:$0xf]
    %v650 = vld [vmem:[%s7 + $0x8] sm:$0xf]
    %v651 = vld [vmem:[%s7 + $0xc] sm:$0xf]
    %v652 = vpack.c.bf16 %v628, %v628
    %v653 = vpack.c.bf16 %v629, %v629
    %v654 = vpack.c.bf16 %v630, %v630
    %v655 = vpack.c.bf16 %v631, %v631
    %v660 = vunpack.c.l.b16 %v648
    %v661 = vunpack.c.l.b16 %v649
    %v662 = vunpack.c.l.b16 %v650
    %v663 = vunpack.c.l.b16 %v651
    %v664 = vpack.c.b16 %v661, %v660
    %v665 = vpack.c.b16 %v663, %v662
    %vm666 = vcmask 64512
    %v668 = vsel %vm666, %v664, 0
    %v671 = vsel %vm666, %v665, 0
    %v674 = vsel %vm189, %v652, 0
    %v677 = vsel %vm189, %v653, 0
    %v680 = vsel %vm189, %v654, 0
    %v683 = vsel %vm189, %v655, 0
    %685 = vmatprep.subr.bf16.mxu0 0
    %686 = vmatpush1.bf16.msra.mxu0 0
    %687 = vmatprep.subr.bf16.mxu0 0
    %688 = vmatpush1.bf16.msra.mxu0 0
    %689 = vmatprep.subr.bf16.mxu0 0
    %690 = vmatpush1.bf16.msra.mxu0 0
    %691 = vmatprep.subr.bf16.mxu0 0
    %692 = vmatpush1.bf16.msra.mxu0 0
    %693 = vmatprep.subr.bf16.mxu0 0
    %694 = vmatpush1.bf16.msra.mxu0 0
    %695 = vmatprep.subr.bf16.mxu0 0
    %696 = vmatpush1.bf16.msra.mxu0 0
    %697 = vmatprep.subr.bf16.mxu0 0
    %698 = vmatpush1.bf16.msra.mxu0 0
    %699 = vmatprep.subr.bf16.mxu0 %v677
    %700 = vmatpush1.bf16.msra.mxu0 %v674
    %701 = vmatprep.subr.bf16.mxu0 0
    %702 = vmatpush2.bf16.msra.mxu0 0
    %703 = vmatprep.subr.bf16.mxu0 0
    %704 = vmatpush2.bf16.msra.mxu0 0
    %705 = vmatprep.subr.bf16.mxu0 0
    %706 = vmatpush2.bf16.msra.mxu0 0
    %707 = vmatprep.subr.bf16.mxu0 0
    %708 = vmatpush2.bf16.msra.mxu0 0
    %709 = vmatprep.subr.bf16.mxu0 0
    %710 = vmatpush2.bf16.msra.mxu0 0
    %711 = vmatprep.subr.bf16.mxu0 0
    %712 = vmatpush2.bf16.msra.mxu0 0
    %713 = vmatprep.subr.bf16.mxu0 0
    %714 = vmatpush2.bf16.msra.mxu0 0
    %715 = vmatprep.subr.bf16.mxu0 0
    %716 = vmatpush2.bf16.msra.mxu0 0
    %717 = vmatprep.mubr.bf16.mxu0 0
    %718 = vmatmul.mubr.bf16.gmra.mxu0 %v668
    %v719 = vpop.f32.mrf.mxu0
    %v720 = vadd.f32 0.0, %v719
    %v721 = vpop.f32.mrf.mxu0
    %v722 = vadd.f32 0.0, %v721
    %v723 = vpop.f32.mrf.mxu0
    %v724 = vadd.f32 0.0, %v723
    %v725 = vpop.f32.mrf.mxu0
    %v726 = vadd.f32 0.0, %v725
    %727 = vmatprep.mubr.bf16.mxu0 0
    %728 = vmatmul.mubr.bf16.gmra.mxu0 %v671
    %v729 = vpop.f32.mrf.mxu0
    %v730 = vadd.f32 0.0, %v729
    %v731 = vpop.f32.mrf.mxu0
    %v732 = vadd.f32 0.0, %v731
    %v733 = vpop.f32.mrf.mxu0
    %v734 = vadd.f32 0.0, %v733
    %v735 = vpop.f32.mrf.mxu0
    %v736 = vadd.f32 0.0, %v735
    %737 = vdwg.mxu0
    %738 = vmatprep.subr.bf16.mxu0 0
    %739 = vmatpush1.bf16.msra.mxu0 0
    %740 = vmatprep.subr.bf16.mxu0 0
    %741 = vmatpush1.bf16.msra.mxu0 0
    %742 = vmatprep.subr.bf16.mxu0 0
    %743 = vmatpush1.bf16.msra.mxu0 0
    %744 = vmatprep.subr.bf16.mxu0 0
    %745 = vmatpush1.bf16.msra.mxu0 0
    %746 = vmatprep.subr.bf16.mxu0 0
    %747 = vmatpush1.bf16.msra.mxu0 0
    %748 = vmatprep.subr.bf16.mxu0 0
    %749 = vmatpush1.bf16.msra.mxu0 0
    %750 = vmatprep.subr.bf16.mxu0 0
    %751 = vmatpush1.bf16.msra.mxu0 0
    %752 = vmatprep.subr.bf16.mxu0 %v683
    %753 = vmatpush1.bf16.msra.mxu0 %v680
    %754 = vmatprep.subr.bf16.mxu0 0
    %755 = vmatpush2.bf16.msra.mxu0 0
    %756 = vmatprep.subr.bf16.mxu0 0
    %757 = vmatpush2.bf16.msra.mxu0 0
    %758 = vmatprep.subr.bf16.mxu0 0
    %759 = vmatpush2.bf16.msra.mxu0 0
    %760 = vmatprep.subr.bf16.mxu0 0
    %761 = vmatpush2.bf16.msra.mxu0 0
    %762 = vmatprep.subr.bf16.mxu0 0
    %763 = vmatpush2.bf16.msra.mxu0 0
    %764 = vmatprep.subr.bf16.mxu0 0
    %765 = vmatpush2.bf16.msra.mxu0 0
    %766 = vmatprep.subr.bf16.mxu0 0
    %767 = vmatpush2.bf16.msra.mxu0 0
    %768 = vmatprep.subr.bf16.mxu0 0
    %769 = vmatpush2.bf16.msra.mxu0 0
    %770 = vmatprep.mubr.bf16.mxu0 0
    %771 = vmatmul.mubr.bf16.gmra.mxu0 %v668
    %v772 = vpop.f32.mrf.mxu0
    %v773 = vadd.f32 0.0, %v772
    %v774 = vpop.f32.mrf.mxu0
    %v775 = vadd.f32 0.0, %v774
    %v776 = vpop.f32.mrf.mxu0
    %v777 = vadd.f32 0.0, %v776
    %v778 = vpop.f32.mrf.mxu0
    %v779 = vadd.f32 0.0, %v778
    %780 = vmatprep.mubr.bf16.mxu0 0
    %781 = vmatmul.mubr.bf16.gmra.mxu0 %v671
    %v782 = vpop.f32.mrf.mxu0
    %v783 = vadd.f32 0.0, %v782
    %v784 = vpop.f32.mrf.mxu0
    %v785 = vadd.f32 0.0, %v784
    %v786 = vpop.f32.mrf.mxu0
    %v787 = vadd.f32 0.0, %v786
    %v788 = vpop.f32.mrf.mxu0
    %v789 = vadd.f32 0.0, %v788
    %790 = vdwg.mxu0
    %v795 = vunpack.c.l.b16 %v632
    %v796 = vunpack.c.l.b16 %v633
    %v797 = vunpack.c.l.b16 %v634
    %v798 = vunpack.c.l.b16 %v635
    %v799 = vpack.c.b16 %v796, %v795
    %v800 = vpack.c.b16 %v798, %v797
    %v802 = vsel %vm518, %v799, 0
    %v805 = vsel %vm518, %v800, 0
    %807 = vmatprep.subr.bf16.mxu0 0
    %808 = vmatpush1.bf16.msra.mxu0 0
    %809 = vmatprep.subr.bf16.mxu0 0
    %810 = vmatpush1.bf16.msra.mxu0 0
    %811 = vmatprep.subr.bf16.mxu0 0
    %812 = vmatpush1.bf16.msra.mxu0 0
    %813 = vmatprep.subr.bf16.mxu0 0
    %814 = vmatpush1.bf16.msra.mxu0 0
    %815 = vmatprep.subr.bf16.mxu0 0
    %816 = vmatpush1.bf16.msra.mxu0 0
    %817 = vmatprep.subr.bf16.mxu0 %v645
    %818 = vmatpush1.bf16.msra.mxu0 %v644
    %819 = vmatprep.subr.bf16.mxu0 %v641
    %820 = vmatpush1.bf16.msra.mxu0 %v640
    %821 = vmatprep.subr.bf16.mxu0 %v637
    %822 = vmatpush1.bf16.msra.mxu0 %v636
    %823 = vmatprep.subr.bf16.mxu0 0
    %824 = vmatpush2.bf16.msra.mxu0 0
    %825 = vmatprep.subr.bf16.mxu0 0
    %826 = vmatpush2.bf16.msra.mxu0 0
    %827 = vmatprep.subr.bf16.mxu0 0
    %828 = vmatpush2.bf16.msra.mxu0 0
    %829 = vmatprep.subr.bf16.mxu0 0
    %830 = vmatpush2.bf16.msra.mxu0 0
    %831 = vmatprep.subr.bf16.mxu0 0
    %832 = vmatpush2.bf16.msra.mxu0 0
    %833 = vmatprep.subr.bf16.mxu0 0
    %834 = vmatpush2.bf16.msra.mxu0 0
    %835 = vmatprep.subr.bf16.mxu0 0
    %836 = vmatpush2.bf16.msra.mxu0 0
    %837 = vmatprep.subr.bf16.mxu0 0
    %838 = vmatpush2.bf16.msra.mxu0 0
    %839 = vmatprep.mubr.bf16.mxu0 0
    %840 = vmatmul.mubr.bf16.gmra.mxu0 %v802
    %v841 = vpop.f32.mrf.mxu0
    %v842 = vadd.f32 %v720, %v841
    %v843 = vpop.f32.mrf.mxu0
    %v844 = vadd.f32 %v722, %v843
    %v845 = vpop.f32.mrf.mxu0
    %v846 = vadd.f32 %v724, %v845
    %v847 = vpop.f32.mrf.mxu0
    %v848 = vadd.f32 %v726, %v847
    %849 = vmatprep.mubr.bf16.mxu0 0
    %850 = vmatmul.mubr.bf16.gmra.mxu0 %v805
    %v851 = vpop.f32.mrf.mxu0
    %v852 = vadd.f32 %v730, %v851
    %v853 = vpop.f32.mrf.mxu0
    %v854 = vadd.f32 %v732, %v853
    %v855 = vpop.f32.mrf.mxu0
    %v856 = vadd.f32 %v734, %v855
    %v857 = vpop.f32.mrf.mxu0
    %v858 = vadd.f32 %v736, %v857
    %859 = vdwg.mxu0
    %860 = vmatprep.subr.bf16.mxu0 0
    %861 = vmatpush1.bf16.msra.mxu0 0
    %862 = vmatprep.subr.bf16.mxu0 0
    %863 = vmatpush1.bf16.msra.mxu0 0
    %864 = vmatprep.subr.bf16.mxu0 0
    %865 = vmatpush1.bf16.msra.mxu0 0
    %866 = vmatprep.subr.bf16.mxu0 0
    %867 = vmatpush1.bf16.msra.mxu0 0
    %868 = vmatprep.subr.bf16.mxu0 0
    %869 = vmatpush1.bf16.msra.mxu0 0
    %870 = vmatprep.subr.bf16.mxu0 %v647
    %871 = vmatpush1.bf16.msra.mxu0 %v646
    %872 = vmatprep.subr.bf16.mxu0 %v643
    %873 = vmatpush1.bf16.msra.mxu0 %v642
    %874 = vmatprep.subr.bf16.mxu0 %v639
    %875 = vmatpush1.bf16.msra.mxu0 %v638
    %876 = vmatprep.subr.bf16.mxu0 0
    %877 = vmatpush2.bf16.msra.mxu0 0
    %878 = vmatprep.subr.bf16.mxu0 0
    %879 = vmatpush2.bf16.msra.mxu0 0
    %880 = vmatprep.subr.bf16.mxu0 0
    %881 = vmatpush2.bf16.msra.mxu0 0
    %882 = vmatprep.subr.bf16.mxu0 0
    %883 = vmatpush2.bf16.msra.mxu0 0
    %884 = vmatprep.subr.bf16.mxu0 0
    %885 = vmatpush2.bf16.msra.mxu0 0
    %886 = vmatprep.subr.bf16.mxu0 0
    %887 = vmatpush2.bf16.msra.mxu0 0
    %888 = vmatprep.subr.bf16.mxu0 0
    %889 = vmatpush2.bf16.msra.mxu0 0
    %890 = vmatprep.subr.bf16.mxu0 0
    %891 = vmatpush2.bf16.msra.mxu0 0
    %892 = vmatprep.mubr.bf16.mxu0 0
    %893 = vmatmul.mubr.bf16.gmra.mxu0 %v802
    %v894 = vpop.f32.mrf.mxu0
    %v895 = vadd.f32 %v773, %v894
    %v896 = vpop.f32.mrf.mxu0
    %v897 = vadd.f32 %v775, %v896
    %v898 = vpop.f32.mrf.mxu0
    %v899 = vadd.f32 %v777, %v898
    %v900 = vpop.f32.mrf.mxu0
    %v901 = vadd.f32 %v779, %v900
    %902 = vmatprep.mubr.bf16.mxu0 0
    %903 = vmatmul.mubr.bf16.gmra.mxu0 %v805
    %v904 = vpop.f32.mrf.mxu0
    %v905 = vadd.f32 %v783, %v904
    %v906 = vpop.f32.mrf.mxu0
    %v907 = vadd.f32 %v785, %v906
    %v908 = vpop.f32.mrf.mxu0
    %v909 = vadd.f32 %v787, %v908
    %v910 = vpop.f32.mrf.mxu0
    %v911 = vadd.f32 %v789, %v910
    %912 = vdwg.mxu0
    %v913 = vld [vmem:[%s8] sm:$0xff]
    %v914 = vld [vmem:[%s8 + $0x8] sm:$0xff]
    %v915 = vld [vmem:[%s8 + $0x10] sm:$0xff]
    %v916 = vld [vmem:[%s8 + $0x18] sm:$0xff]
    %918 = vset.pattern.permute.xlu0 0
    %919 = vperm.xlu0 %918, %v913
    %v920 = vpop.permute.xlu0 %919
    %923 = vset.pattern.permute.xlu0 0
    %924 = vperm.xlu0 %923, %v914
    %v925 = vpop.permute.xlu0 %924
    %928 = vset.pattern.permute.xlu0 0
    %929 = vperm.xlu0 %928, %v915
    %v930 = vpop.permute.xlu0 %929
    %933 = vset.pattern.permute.xlu0 0
    %934 = vperm.xlu0 %933, %v916
    %v935 = vpop.permute.xlu0 %934
    %v937 = vadd.f32 %v842, %v920
    %v938 = vadd.f32 %v844, %v920
    %v939 = vadd.f32 %v895, %v920
    %v940 = vadd.f32 %v897, %v920
    %v941 = vadd.f32 %v846, %v925
    %v942 = vadd.f32 %v848, %v925
    %v943 = vadd.f32 %v899, %v925
    %v944 = vadd.f32 %v901, %v925
    %v945 = vadd.f32 %v852, %v930
    %v946 = vadd.f32 %v854, %v930
    %v947 = vadd.f32 %v905, %v930
    %v948 = vadd.f32 %v907, %v930
    %v949 = vadd.f32 %v856, %v935
    %v950 = vadd.f32 %v858, %v935
    %v951 = vadd.f32 %v909, %v935
    %v952 = vadd.f32 %v911, %v935
    %v953 = vmul.f32 %v937, 0.01
    %v954 = vmul.f32 %v938, 0.01
    %v955 = vmul.f32 %v939, 0.01
    %v956 = vmul.f32 %v940, 0.01
    %v957 = vmul.f32 %v941, 0.01
    %v958 = vmul.f32 %v942, 0.01
    %v959 = vmul.f32 %v943, 0.01
    %v960 = vmul.f32 %v944, 0.01
    %v961 = vmul.f32 %v945, 0.01
    %v962 = vmul.f32 %v946, 0.01
    %v963 = vmul.f32 %v947, 0.01
    %v964 = vmul.f32 %v948, 0.01
    %v965 = vmul.f32 %v949, 0.01
    %v966 = vmul.f32 %v950, 0.01
    %v967 = vmul.f32 %v951, 0.01
    %v968 = vmul.f32 %v952, 0.01
    %v969 = vmax.f32 %v937, %v953
    %v970 = vmax.f32 %v938, %v954
    %v971 = vmax.f32 %v939, %v955
    %v972 = vmax.f32 %v940, %v956
    %v973 = vmax.f32 %v941, %v957
    %v974 = vmax.f32 %v942, %v958
    %v975 = vmax.f32 %v943, %v959
    %v976 = vmax.f32 %v944, %v960
    %v977 = vmax.f32 %v945, %v961
    %v978 = vmax.f32 %v946, %v962
    %v979 = vmax.f32 %v947, %v963
    %v980 = vmax.f32 %v948, %v964
    %v981 = vmax.f32 %v949, %v965
    %v982 = vmax.f32 %v950, %v966
    %v983 = vmax.f32 %v951, %v967
    %v984 = vmax.f32 %v952, %v968
    %v985 = vld [vmem:[%s9] sm:$0x3]
    %v986 = vpack.c.bf16 %v973, %v969
    %v987 = vpack.c.bf16 %v974, %v970
    %v988 = vpack.c.bf16 %v975, %v971
    %v989 = vpack.c.bf16 %v976, %v972
    %v990 = vpack.c.bf16 %v981, %v977
    %v991 = vpack.c.bf16 %v982, %v978
    %v992 = vpack.c.bf16 %v983, %v979
    %v993 = vpack.c.bf16 %v984, %v980
    %v994 = vld [vmem:[%s10] sm:$0x7]
    %996 = vset.pattern.permute.xlu0 0
    %997 = vperm.xlu0 %996, %v994
    %v998 = vpop.permute.xlu0 %997
    %vm1000 = vcmask 261120
    %v1002 = vsel %vm1000, %v985, 0
    %1004 = vmatprep.subr.bf16.mxu0 0
    %1005 = vmatpush1.bf16.msra.mxu0 0
    %1006 = vmatprep.subr.bf16.mxu0 0
    %1007 = vmatpush1.bf16.msra.mxu0 0
    %1008 = vmatprep.subr.bf16.mxu0 0
    %1009 = vmatpush1.bf16.msra.mxu0 0
    %1010 = vmatprep.subr.bf16.mxu0 0
    %1011 = vmatpush1.bf16.msra.mxu0 0
    %1012 = vmatprep.subr.bf16.mxu0 0
    %1013 = vmatpush1.bf16.msra.mxu0 0
    %1014 = vmatprep.subr.bf16.mxu0 0
    %1015 = vmatpush1.bf16.msra.mxu0 0
    %1016 = vmatprep.subr.bf16.mxu0 %v991
    %1017 = vmatpush1.bf16.msra.mxu0 %v990
    %1018 = vmatprep.subr.bf16.mxu0 %v987
    %1019 = vmatpush1.bf16.msra.mxu0 %v986
    %1020 = vmatprep.subr.bf16.mxu0 0
    %1021 = vmatpush2.bf16.msra.mxu0 0
    %1022 = vmatprep.subr.bf16.mxu0 0
    %1023 = vmatpush2.bf16.msra.mxu0 0
    %1024 = vmatprep.subr.bf16.mxu0 0
    %1025 = vmatpush2.bf16.msra.mxu0 0
    %1026 = vmatprep.subr.bf16.mxu0 0
    %1027 = vmatpush2.bf16.msra.mxu0 0
    %1028 = vmatprep.subr.bf16.mxu0 0
    %1029 = vmatpush2.bf16.msra.mxu0 0
    %1030 = vmatprep.subr.bf16.mxu0 0
    %1031 = vmatpush2.bf16.msra.mxu0 0
    %1032 = vmatprep.subr.bf16.mxu0 0
    %1033 = vmatpush2.bf16.msra.mxu0 0
    %1034 = vmatprep.subr.bf16.mxu0 0
    %1035 = vmatpush2.bf16.msra.mxu0 0
    %1036 = vmatprep.mubr.bf16.mxu0 0
    %1037 = vmatmul.mubr.bf16.gmra.mxu0 %v1002
    %v1038 = vpop.f32.mrf.mxu0
    %v1039 = vadd.f32 %v998, %v1038
    %v1040 = vpop.f32.mrf.mxu0
    %v1041 = vadd.f32 %v998, %v1040
    %v1042 = vpop.f32.mrf.mxu0
    %v1043 = vpop.f32.mrf.mxu0
    %1044 = vdwg.mxu0
    %1045 = vmatprep.subr.bf16.mxu0 0
    %1046 = vmatpush1.bf16.msra.mxu0 0
    %1047 = vmatprep.subr.bf16.mxu0 0
    %1048 = vmatpush1.bf16.msra.mxu0 0
    %1049 = vmatprep.subr.bf16.mxu0 0
    %1050 = vmatpush1.bf16.msra.mxu0 0
    %1051 = vmatprep.subr.bf16.mxu0 0
    %1052 = vmatpush1.bf16.msra.mxu0 0
    %1053 = vmatprep.subr.bf16.mxu0 0
    %1054 = vmatpush1.bf16.msra.mxu0 0
    %1055 = vmatprep.subr.bf16.mxu0 0
    %1056 = vmatpush1.bf16.msra.mxu0 0
    %1057 = vmatprep.subr.bf16.mxu0 %v993
    %1058 = vmatpush1.bf16.msra.mxu0 %v992
    %1059 = vmatprep.subr.bf16.mxu0 %v989
    %1060 = vmatpush1.bf16.msra.mxu0 %v988
    %1061 = vmatprep.subr.bf16.mxu0 0
    %1062 = vmatpush2.bf16.msra.mxu0 0
    %1063 = vmatprep.subr.bf16.mxu0 0
    %1064 = vmatpush2.bf16.msra.mxu0 0
    %1065 = vmatprep.subr.bf16.mxu0 0
    %1066 = vmatpush2.bf16.msra.mxu0 0
    %1067 = vmatprep.subr.bf16.mxu0 0
    %1068 = vmatpush2.bf16.msra.mxu0 0
    %1069 = vmatprep.subr.bf16.mxu0 0
    %1070 = vmatpush2.bf16.msra.mxu0 0
    %1071 = vmatprep.subr.bf16.mxu0 0
    %1072 = vmatpush2.bf16.msra.mxu0 0
    %1073 = vmatprep.subr.bf16.mxu0 0
    %1074 = vmatpush2.bf16.msra.mxu0 0
    %1075 = vmatprep.subr.bf16.mxu0 0
    %1076 = vmatpush2.bf16.msra.mxu0 0
    %1077 = vmatprep.mubr.bf16.mxu0 0
    %1078 = vmatmul.mubr.bf16.gmra.mxu0 %v1002
    %v1079 = vpop.f32.mrf.mxu0
    %v1080 = vadd.f32 %v998, %v1079
    %v1081 = vpop.f32.mrf.mxu0
    %v1082 = vadd.f32 %v998, %v1081
    %v1083 = vpop.f32.mrf.mxu0
    %v1084 = vpop.f32.mrf.mxu0
    %1085 = vdwg.mxu0
    %1086 = vst [vmem:[%s11] sm:$0xff] %v628
    %1087 = vst [vmem:[%s11 + $0x8] sm:$0xff] %v629
    %1088 = vst [vmem:[%s11 + $0x10] sm:$0xff] %v630
    %1089 = vst [vmem:[%s11 + $0x18] sm:$0xff] %v631
    %1090 = vst [vmem:[%s11 + $0x20] sm:$0xff] %v557
    %1091 = vst [vmem:[%s11 + $0x28] sm:$0xff] %v559
    %1092 = vst [vmem:[%s11 + $0x30] sm:$0xff] %v600
    %1093 = vst [vmem:[%s11 + $0x38] sm:$0xff] %v602
    %1094 = vst [vmem:[%s11 + $0x40] sm:$0xff] %v561
    %1095 = vst [vmem:[%s11 + $0x48] sm:$0xff] %v563
    %1096 = vst [vmem:[%s11 + $0x50] sm:$0xff] %v604
    %1097 = vst [vmem:[%s11 + $0x58] sm:$0xff] %v606
    %1098 = vst [vmem:[%s11 + $0x60] sm:$0x7] %v1039
    %1099 = vst [vmem:[%s11 + $0x68] sm:$0x7] %v1041
    %1100 = vst [vmem:[%s11 + $0x70] sm:$0x7] %v1080
    %1101 = vst [vmem:[%s11 + $0x78] sm:$0x7] %v1082
    %v1102 = vsub.f32 %v1039, %v44
    %v1103 = vsub.f32 %v1041, %v45
    %v1104 = vsub.f32 %v1080, %v46
    %v1105 = vsub.f32 %v1082, %v47
    %v1106 = vmul.f32 %v1102, %v1102
    %v1107 = vmul.f32 %v1103, %v1103
    %v1108 = vmul.f32 %v1104, %v1104
    %v1109 = vmul.f32 %v1105, %v1105
    %vm1110 = vcmask 1042432
    %v1111 = vsel %vm1110, %v1106, 0.0
    %v1112 = vsel %vm1110, %v1107, 0.0
    %v1113 = vadd.f32 %v1111, %v1112
    %v1114 = vsel %vm1110, %v1108, 0.0
    %v1115 = vadd.f32 %v1113, %v1114
    %v1116 = vsel %vm1110, %v1109, 0.0
    %v1117 = vadd.f32 %v1115, %v1116
    %1118 = vadd.xlane.f32.xlu0 %v1117
    %v1119 = vpop.xlane.xlu0 %1118
    %v1120 = vrot.slane %v1119, 4
    %v1121 = vadd.f32 %v1119, %v1120
    %v1122 = vrot.slane %v1121, 2
    %v1123 = vadd.f32 %v1121, %v1122
    %v1124 = vrot.slane %v1123, 1
    %v1125 = vadd.f32 %v1123, %v1124
    %s1126 = vtos %v1125
    %s1127 = smul.f32 %s1126, 0.0006510417
    %s1128 = scalar_lea.smem [#allocation2], 0
    %1129 = sst [smem:[%s1128]] %s1127
    %v1130 = vadd.f32 %v561, 1.0
    %v1131 = vadd.f32 %v563, 1.0
    %v1132 = vadd.f32 %v604, 1.0
    %v1133 = vadd.f32 %v606, 1.0
    %v1134 = vmul.f32 %v557, %v557
    %v1135 = vmul.f32 %v559, %v559
    %v1136 = vmul.f32 %v600, %v600
    %v1137 = vmul.f32 %v602, %v602
    %v1138 = vsub.f32 %v1130, %v1134
    %v1139 = vsub.f32 %v1131, %v1135
    %v1140 = vsub.f32 %v1132, %v1136
    %v1141 = vsub.f32 %v1133, %v1137
    %v1142 = vmul.f32 %v613, %v613
    %v1143 = vmul.f32 %v615, %v615
    %v1144 = vmul.f32 %v617, %v617
    %v1145 = vmul.f32 %v619, %v619
    %v1146 = vsub.f32 %v1138, %v1142
    %v1147 = vsub.f32 %v1139, %v1143
    %v1148 = vsub.f32 %v1140, %v1144
    %v1149 = vsub.f32 %v1141, %v1145
    %v1150 = vadd.f32 %v1146, %v1147
    %v1151 = vadd.f32 %v1150, %v1148
    %v1152 = vadd.f32 %v1151, %v1149
    %1153 = vadd.xlane.f32.xlu0 %v1152
    %v1154 = vpop.xlane.xlu0 %1153
    %v1155 = vrot.slane %v1154, 4
    %v1156 = vadd.f32 %v1154, %v1155
    %v1157 = vrot.slane %v1156, 2
    %v1158 = vadd.f32 %v1156, %v1157
    %v1159 = vrot.slane %v1158, 1
    %v1160 = vadd.f32 %v1158, %v1159
    %s1161 = vtos %v1160
    %s1162 = smul.f32 %s1161, -0.5
    %s1163 = smul.f32 %s1162, 0.5
    %s1164 = scalar_lea.smem [#allocation4], 0
    %1165 = sst [smem:[%s1164]] %s1163
    // Predicated region
    $region46: #{vae_one_step.1} parent=1 // pred_check
      _
    $region47: #{vae_one_step.1} parent=1 // pred_check_branch
      %1167 = sbr.rel (0) target = $region49
    $region48: #{vae_one_step.1} parent=1 // pred_region
      _
    $region49: #{vae_one_step.1} parent=1 // pred_fallthru
      _
    // Predicated region
    $region50: #{vae_one_step.1} parent=1 // pred_check
      _
    $region51: #{vae_one_step.1} parent=1 // pred_check_branch
      %1169 = sbr.rel (0) target = $region53
    $region52: #{vae_one_step.1} parent=1 // pred_region
      %s1171 = ssub.s32 16, 16
      %1172 = vsyncadd [#allocation3], %s1171
      %1175 = dma.smem_to_hbm [#allocation2], 16, %s12, [#allocation3]
    $region53: #{vae_one_step.1} parent=1 // pred_fallthru
      _
    // Predicated region
    $region54: #{vae_one_step.1} parent=1 // pred_check
      _
    $region55: #{vae_one_step.1} parent=1 // pred_check_branch
      %1177 = sbr.rel (0) target = $region57
    $region56: #{vae_one_step.1} parent=1 // pred_region
      %s1179 = ssub.s32 16, 16
      %1180 = vsyncadd [#allocation5], %s1179
      %1183 = dma.smem_to_hbm [#allocation4], 16, %s13, [#allocation5]
    $region57: #{vae_one_step.1} parent=1 // pred_fallthru
      _
    // Predicated region
    $region58: #{vae_one_step.1} parent=1 // pred_check
      _
    $region59: #{vae_one_step.1} parent=1 // pred_check_branch
      %1185 = sbr.rel (0) target = $region61
    $region60: #{vae_one_step.1} parent=1 // pred_region
      _
    $region61: #{vae_one_step.1} parent=1 // pred_fallthru
      _
    // Predicated region
    $region62: #{vae_one_step.1} parent=1 // pred_check
      _
    $region63: #{vae_one_step.1} parent=1 // pred_check_branch
      %1187 = sbr.rel (0) target = $region65
    $region64: #{vae_one_step.1} parent=1 // pred_region
      %1188 = dma.done [#allocation3], 16
    $region65: #{vae_one_step.1} parent=1 // pred_fallthru
      _
    // Predicated region
    $region66: #{vae_one_step.1} parent=1 // pred_check
      _
    $region67: #{vae_one_step.1} parent=1 // pred_check_branch
      %1190 = sbr.rel (0) target = $region69
    $region68: #{vae_one_step.1} parent=1 // pred_region
      %1191 = dma.done [#allocation5], 16
    $region69: #{vae_one_step.1} parent=1 // pred_fallthru
      _
    %1192 = sfence
    %1193 = vsyncpa [#allocation3], 1
    %1194 = vsyncpa [#allocation5], 1

</llo_original>
